<compile_context>
chip_gen: v7x
topology: tpu7x:2x2x1
jax: 0.10.0
libtpu: 0.0.40
codegen_flags: <defaults>
</compile_context>

<pallas_src>
import jax
import jax.numpy as jnp
import numpy as np
from jax import lax
from jax.experimental import pallas as pl
from jax.experimental.pallas import tpu as pltpu

LOW_THRESHOLD = 0.05 * 255.0
HIGH_THRESHOLD = 0.85 * 255.0
MAX_BOXES = 32  # TODO(synk): components beyond 32 are silently dropped (module is dynamic).


def _round_up(x, m):
    return (x + m - 1) // m * m


def make_canny_kernel(H, W, HP, WP, low_thr, high_thr, k_unroll=16):
    """Fused Canny + dilate + erode + connected-components kernel (single image)."""
    max_outer = (H * W + k_unroll - 1) // k_unroll + 1  # worst-case cap; early exit below
    BIG = 1 << 30  # plain Python int -> jaxpr literal (a jnp constant would be captured)

    def lane(x, dj):   # result[i, j] = x[i, (j + dj) % WP]   (lane roll, XLU)
        return pltpu.roll(x, (-dj) % WP, 1)

    def row(x, di):    # result[i, j] = x[(i + di) % HP, j]   (sublane roll, XLU)
        return pltpu.roll(x, (-di) % HP, 0)

    def box3(x, op):
        # Exact separable 3x3 window reduce (includes center): 4 rolls + 4 ops per step.
        # TODO(synk): on v6e/v7x the two sublane rolls could move off the 2 XLU units via
        # a (HP+2, WP) VMEM scratch + shifted loads (perf review); kept as rolls for
        # portable, known-good lowering (and because it is the right choice on v5e).
        r = op(x, op(lane(x, 1), lane(x, -1)))
        return op(r, op(row(r, 1), row(r, -1)))

    def kernel(img_ref, labels_ref):
        # img_ref: (HP, WP) uint8 packed image (+wrap-reachable replicate halo).
        # labels_ref: (HP, WP) int32 output (0 = background).
        x = img_ref[...].astype(jnp.float32)            # one full load, uint8 -> f32

        # ---- Sobel 3x3 (8 one-time rolls, reusing the E/W shifted maps) --------------
        xe, xw = lane(x, 1), lane(x, -1)
        xn, xs = row(x, -1), row(x, 1)
        xne, xse = row(xe, -1), row(xe, 1)
        xnw, xsw = row(xw, -1), row(xw, 1)
        # TODO(synk): cv2.Sobel default border is BORDER_REFLECT_101; replicate used here.
        gx = (xne - xnw) + 2.0 * (xe - xw) + (xse - xsw)
        gy = (xsw - xnw) + 2.0 * (xs - xn) + (xse - xne)

        rows_i = lax.broadcasted_iota(jnp.int32, (HP, WP), 0)
        cols_i = lax.broadcasted_iota(jnp.int32, (HP, WP), 1)
        valid = (rows_i < H) & (cols_i < W)

        # L1 magnitude (cv2.Canny default), zeroed outside the image so that roll
        # wrap-around always reads the propagation-neutral value.
        mag = jnp.where(valid, jnp.abs(gx) + jnp.abs(gy), 0.0)

        # ---- Non-max suppression (one-time, 8 rolls) ----------------------------------
        m_e, m_w = lane(mag, 1), lane(mag, -1)
        m_n, m_s = row(mag, -1), row(mag, 1)
        m_ne, m_se = row(m_e, -1), row(m_e, 1)
        m_nw, m_sw = row(m_w, -1), row(m_w, 1)

        ax, ay = jnp.abs(gx), jnp.abs(gy)
        is_h = ay <= ax * 0.41421356      # gradient ~horizontal -> compare E/W
        is_v = ay > ax * 2.41421356       # gradient ~vertical   -> compare N/S
        same = (gx * gy) >= 0.0           # which diagonal
        nb1 = jnp.where(is_h, m_e, jnp.where(is_v, m_s, jnp.where(same, m_se, m_sw)))
        nb2 = jnp.where(is_h, m_w, jnp.where(is_v, m_n, jnp.where(same, m_nw, m_ne)))
        # TODO(synk): cv2 breaks plateau ties strictly on one side; >= on both used here.
        keep = (mag >= nb1) & (mag >= nb2)
        nms = jnp.where(keep, mag, 0.0)

        cand = (nms >= low_thr).astype(jnp.float32)     # 0/1; 0 on all guard cells
        strong = (nms >= high_thr).astype(jnp.float32)  # seeds (strong => cand)

        # ---- Hysteresis: new = cand * 3x3max(new); monotone non-decreasing, so the
        #      carried scalar sum is a sufficient convergence check (no full-array
        #      compare, no previous-state buffer kept live). --------------------------
        def hyst_cond(c):
            i, changed, _, _ = c
            return jnp.logical_and(changed > 0, i < max_outer)

        def hyst_body(c):
            i, _, e, s = c
            new = e
            for _ in range(k_unroll):                   # statically unrolled inner steps
                new = cand * box3(new, jnp.maximum)
            ns = jnp.sum(new)                           # exact: 0/1 values, < 2^24 px
            return (i + 1, (ns != s).astype(jnp.int32), new, ns)

        _, _, edges, _ = lax.while_loop(
            hyst_cond, hyst_body,
            (jnp.int32(0), jnp.int32(1), strong, jnp.sum(strong)))

        # ---- 3x3 dilate then 3x3 erode (cv2 defaults: border acts as 0 for dilate,
        #      1 for erode). -----------------------------------------------------------
        d = box3(edges, jnp.maximum)
        d = jnp.where(valid, d, 1.0)                    # erosion never eats the border
        e_bin = (box3(d, jnp.minimum) > 0.5) & valid

        # ---- 8-connected components: min-label propagation; bg=BIG folds the boolean
        #      mask into a single max per step. -----------------------------------------
        # TODO(synk): labels are (min raster index + 1), not compacted 1..N like cv2.
        raster = rows_i * W + cols_i + 1
        bg = jnp.where(e_bin, 0, BIG)
        init_lbl = jnp.where(e_bin, raster, BIG)

        def ccl_cond(c):
            i, changed, _ = c
            return jnp.logical_and(changed > 0, i < max_outer)

        def ccl_body(c):
            i, _, lbl = c
            new = lbl
            for _ in range(k_unroll):
                new = jnp.maximum(box3(new, jnp.minimum), bg)
            changed = jnp.sum((new != lbl).astype(jnp.int32))  # once per k_unroll steps
            return (i + 1, changed, new)

        _, _, lbl = lax.while_loop(ccl_cond, ccl_body,
                                   (jnp.int32(0), jnp.int32(1), init_lbl))
        labels_ref[...] = jnp.where(e_bin, lbl, 0)

    return kernel


def _vmem_limit_bytes():
    # Per-generation VMEM budget: physical capacity minus headroom for Mosaic's own
    # scratch (v5e/v6e: 128 MiB -> ~112 MiB, v7x: 64 MiB -> ~56 MiB).
    default_cap = 64 * 1024 * 1024
    try:
        cap = int(getattr(pltpu.get_tpu_info(), "vmem_capacity_bytes", default_cap))
    except Exception:  # no TPU devices / interpret mode
        cap = default_cap
    return max(cap - max(cap // 8, 8 * 1024 * 1024), 16 * 1024 * 1024)


def run_canny_pallas(xin, H, W):
    HP, WP = xin.shape
    kernel = make_canny_kernel(H, W, HP, WP, LOW_THRESHOLD, HIGH_THRESHOLD)
    # No grid: single invocation, whole image resident in VMEM, single-buffered
    # (grid=(1,) auto double-buffering would only waste VMEM here).
    return pl.pallas_call(
        kernel,
        out_shape=jax.ShapeDtypeStruct((HP, WP), jnp.int32),
        in_specs=[pl.BlockSpec(memory_space=pltpu.MemorySpace.VMEM)],
        out_specs=pl.BlockSpec(memory_space=pltpu.MemorySpace.VMEM),
        compiler_params=pltpu.CompilerParams(vmem_limit_bytes=_vmem_limit_bytes()),
    )(xin)
    # TODO(synk): on v7x the pixel-local Sobel/NMS stage should become a row-strip grid
    # with dimension_semantics=("parallel",) to use both TensorCores.


def boxes_from_labels(labels, max_boxes):
    """Per-component [x, y, w, h] (cv2.connectedComponentsWithStats column order).

    Labels are `min raster index + 1`, so a pixel is its component's unique root iff
    labels == its own raster index + 1.  lax.top_k over the root values yields the
    (already unique) component label list without sorting the whole image; then
    max_boxes dense masked reductions produce the boxes."""
    H, W = labels.shape
    BIG = 1 << 30
    rows = jnp.arange(H, dtype=jnp.int32)[:, None]
    cols = jnp.arange(W, dtype=jnp.int32)[None, :]
    raster = rows * W + cols + 1
    is_root = labels == raster
    n_total = jnp.sum(is_root.astype(jnp.int32))
    root_vals = jnp.where(is_root, labels, BIG).reshape(-1)
    neg_top, _ = lax.top_k(-root_vals, max_boxes)
    uniq = -neg_top                          # ascending component labels, BIG-padded

    def one_box(lab):
        present = lab < BIG
        m = labels == lab
        minx = jnp.min(jnp.where(m, cols, BIG))
        maxx = jnp.max(jnp.where(m, cols, -1))
        miny = jnp.min(jnp.where(m, rows, BIG))
        maxy = jnp.max(jnp.where(m, rows, -1))
        box = jnp.stack([minx, miny, maxx - minx + 1, maxy - miny + 1])
        return jnp.where(present, box, -1)

    boxes = jax.vmap(one_box)(uniq).astype(jnp.int32)
    return boxes, jnp.minimum(n_total, max_boxes)


@jax.jit
def canny_forward(input_img):
    # input_img: (1, H, W) uint8 — matches the torch module's input_img.squeeze(0)
    img = input_img[0].astype(jnp.uint8)
    H, W = img.shape
    HP = _round_up(H + 2, 8)      # >=1 neutral guard row beyond the halo, sublane aligned
    WP = _round_up(W + 2, 128)    # >=1 neutral guard col beyond the halo, lane-dense
    # Pack image + replicate Sobel halo into one lane-dense uint8 array: bottom/right
    # halo at row H / col W, top/left halo at row HP-1 / col WP-1 (reached by roll
    # wrap-around inside the kernel).  uint8 keeps the HBM->VMEM DMA at 1 B/px.
    p = jnp.pad(img, 1, mode="edge")                       # (H+2, W+2)
    xin = jnp.zeros((HP, WP), jnp.uint8)
    xin = xin.at[0:H + 1, 0:W + 1].set(p[1:, 1:])          # image + bottom/right halo
    xin = xin.at[HP - 1, 0:W + 1].set(p[0, 1:])            # top halo (via wrap)
    xin = xin.at[0:H + 1, WP - 1].set(p[1:, 0])            # left halo (via wrap)
    xin = xin.at[HP - 1, WP - 1].set(p[0, 0])              # top-left corner
    labels = run_canny_pallas(xin, H, W)[:H, :W]           # Pallas hot path
    boxes, n = boxes_from_labels(labels, MAX_BOXES)
    # TODO(synk): the torch module returns a dynamic (num_labels-1, 4) tensor; here a
    # static (MAX_BOXES, 4) array padded with -1 plus the true (clamped) count.
    return boxes, n


if __name__ == "__main__":
    H = W = 16
    key = jax.random.PRNGKey(0)
    base = jnp.zeros((H, W), jnp.float32).at[4:12, 3:10].set(200.0)
    noise = jax.random.uniform(key, (H, W), jnp.float32, 0.0, 20.0)
    img = jnp.clip(base + noise, 0.0, 255.0).astype(jnp.uint8)[None]     # (1, H, W)

    boxes, n = canny_forward(img)
    jax.block_until_ready((boxes, n))

    num = int(n)
    result = np.asarray(boxes)[:num]          # dynamic (num_boxes, 4) like the module
    assert result.ndim == 2 and result.shape[1] == 4
    print("KERNEL_OK")
</pallas_src>

<mosaic_0001>
module attributes {stable_mosaic.version = 11 : i64} {
  func.func @kernel(%arg0: memref<24x128xi8, #tpu.memory_space<vmem>>, %arg1: memref<24x128xi32, #tpu.memory_space<vmem>>) attributes {dimension_semantics = [], scalar_prefetch = 0 : i64, scratch_operands = 0 : i64, tpu.core_type = #tpu.core_type<tc>} {
    %c0 = arith.constant 0 : index
    %c0_0 = arith.constant 0 : index
    %0 = vector.load %arg0[%c0, %c0_0] : memref<24x128xi8, #tpu.memory_space<vmem>>, vector<24x128xi8>
    %1 = arith.uitofp %0 : vector<24x128xi8> to vector<24x128xf32>
    %c127_i32 = arith.constant 127 : i32
    %2 = tpu.dynamic_rotate %1 by %c127_i32 dim 1 : vector<24x128xf32>, i32 -> vector<24x128xf32>
    %c1_i32 = arith.constant 1 : i32
    %3 = tpu.dynamic_rotate %1 by %c1_i32 dim 1 : vector<24x128xf32>, i32 -> vector<24x128xf32>
    %c1_i32_1 = arith.constant 1 : i32
    %4 = tpu.dynamic_rotate %1 by %c1_i32_1 dim 0 : vector<24x128xf32>, i32 -> vector<24x128xf32>
    %c23_i32 = arith.constant 23 : i32
    %5 = tpu.dynamic_rotate %1 by %c23_i32 dim 0 : vector<24x128xf32>, i32 -> vector<24x128xf32>
    %c1_i32_2 = arith.constant 1 : i32
    %6 = tpu.dynamic_rotate %2 by %c1_i32_2 dim 0 : vector<24x128xf32>, i32 -> vector<24x128xf32>
    %c23_i32_3 = arith.constant 23 : i32
    %7 = tpu.dynamic_rotate %2 by %c23_i32_3 dim 0 : vector<24x128xf32>, i32 -> vector<24x128xf32>
    %c1_i32_4 = arith.constant 1 : i32
    %8 = tpu.dynamic_rotate %3 by %c1_i32_4 dim 0 : vector<24x128xf32>, i32 -> vector<24x128xf32>
    %c23_i32_5 = arith.constant 23 : i32
    %9 = tpu.dynamic_rotate %3 by %c23_i32_5 dim 0 : vector<24x128xf32>, i32 -> vector<24x128xf32>
    %10 = arith.subf %6, %8 : vector<24x128xf32>
    %11 = arith.subf %2, %3 : vector<24x128xf32>
    %cst = arith.constant 2.000000e+00 : f32
    %12 = vector.broadcast %cst : f32 to vector<24x128xf32>
    %13 = arith.mulf %12, %11 : vector<24x128xf32>
    %14 = arith.addf %10, %13 : vector<24x128xf32>
    %15 = arith.subf %7, %9 : vector<24x128xf32>
    %16 = arith.addf %14, %15 : vector<24x128xf32>
    %17 = arith.subf %9, %8 : vector<24x128xf32>
    %18 = arith.subf %5, %4 : vector<24x128xf32>
    %cst_6 = arith.constant 2.000000e+00 : f32
    %19 = vector.broadcast %cst_6 : f32 to vector<24x128xf32>
    %20 = arith.mulf %19, %18 : vector<24x128xf32>
    %21 = arith.addf %17, %20 : vector<24x128xf32>
    %22 = arith.subf %7, %6 : vector<24x128xf32>
    %23 = arith.addf %21, %22 : vector<24x128xf32>
    %24 = tpu.iota {dimensions = array<i32: 0>} : vector<24x128xi32>
    %25 = tpu.iota {dimensions = array<i32: 1>} : vector<24x128xi32>
    %c16_i32 = arith.constant 16 : i32
    %26 = vector.broadcast %c16_i32 : i32 to vector<24x128xi32>
    %27 = arith.cmpi slt, %24, %26 : vector<24x128xi32>
    %c16_i32_7 = arith.constant 16 : i32
    %28 = vector.broadcast %c16_i32_7 : i32 to vector<24x128xi32>
    %29 = arith.cmpi slt, %25, %28 : vector<24x128xi32>
    %30 = arith.andi %27, %29 : vector<24x128xi1>
    %31 = math.absf %16 : vector<24x128xf32>
    %32 = math.absf %23 : vector<24x128xf32>
    %33 = arith.addf %31, %32 : vector<24x128xf32>
    %cst_8 = arith.constant 0.000000e+00 : f32
    %34 = vector.broadcast %cst_8 : f32 to vector<24x128xf32>
    %35 = arith.select %30, %33, %34 : vector<24x128xi1>, vector<24x128xf32>
    %c127_i32_9 = arith.constant 127 : i32
    %36 = tpu.dynamic_rotate %35 by %c127_i32_9 dim 1 : vector<24x128xf32>, i32 -> vector<24x128xf32>
    %c1_i32_10 = arith.constant 1 : i32
    %37 = tpu.dynamic_rotate %35 by %c1_i32_10 dim 1 : vector<24x128xf32>, i32 -> vector<24x128xf32>
    %c1_i32_11 = arith.constant 1 : i32
    %38 = tpu.dynamic_rotate %35 by %c1_i32_11 dim 0 : vector<24x128xf32>, i32 -> vector<24x128xf32>
    %c23_i32_12 = arith.constant 23 : i32
    %39 = tpu.dynamic_rotate %35 by %c23_i32_12 dim 0 : vector<24x128xf32>, i32 -> vector<24x128xf32>
    %c1_i32_13 = arith.constant 1 : i32
    %40 = tpu.dynamic_rotate %36 by %c1_i32_13 dim 0 : vector<24x128xf32>, i32 -> vector<24x128xf32>
    %c23_i32_14 = arith.constant 23 : i32
    %41 = tpu.dynamic_rotate %36 by %c23_i32_14 dim 0 : vector<24x128xf32>, i32 -> vector<24x128xf32>
    %c1_i32_15 = arith.constant 1 : i32
    %42 = tpu.dynamic_rotate %37 by %c1_i32_15 dim 0 : vector<24x128xf32>, i32 -> vector<24x128xf32>
    %c23_i32_16 = arith.constant 23 : i32
    %43 = tpu.dynamic_rotate %37 by %c23_i32_16 dim 0 : vector<24x128xf32>, i32 -> vector<24x128xf32>
    %44 = math.absf %16 : vector<24x128xf32>
    %45 = math.absf %23 : vector<24x128xf32>
    %cst_17 = arith.constant 0.414213568 : f32
    %46 = vector.broadcast %cst_17 : f32 to vector<24x128xf32>
    %47 = arith.mulf %44, %46 : vector<24x128xf32>
    %48 = arith.cmpf ole, %45, %47 : vector<24x128xf32>
    %cst_18 = arith.constant 2.41421366 : f32
    %49 = vector.broadcast %cst_18 : f32 to vector<24x128xf32>
    %50 = arith.mulf %44, %49 : vector<24x128xf32>
    %51 = arith.cmpf ogt, %45, %50 : vector<24x128xf32>
    %52 = arith.mulf %16, %23 : vector<24x128xf32>
    %cst_19 = arith.constant 0.000000e+00 : f32
    %53 = vector.broadcast %cst_19 : f32 to vector<24x128xf32>
    %54 = arith.cmpf oge, %52, %53 : vector<24x128xf32>
    %55 = arith.select %54, %41, %43 : vector<24x128xi1>, vector<24x128xf32>
    %56 = arith.select %51, %39, %55 : vector<24x128xi1>, vector<24x128xf32>
    %57 = arith.select %48, %36, %56 : vector<24x128xi1>, vector<24x128xf32>
    %58 = arith.select %54, %42, %40 : vector<24x128xi1>, vector<24x128xf32>
    %59 = arith.select %51, %38, %58 : vector<24x128xi1>, vector<24x128xf32>
    %60 = arith.select %48, %37, %59 : vector<24x128xi1>, vector<24x128xf32>
    %61 = arith.cmpf oge, %35, %57 : vector<24x128xf32>
    %62 = arith.cmpf oge, %35, %60 : vector<24x128xf32>
    %63 = arith.andi %61, %62 : vector<24x128xi1>
    %cst_20 = arith.constant 0.000000e+00 : f32
    %64 = vector.broadcast %cst_20 : f32 to vector<24x128xf32>
    %65 = arith.select %63, %35, %64 : vector<24x128xi1>, vector<24x128xf32>
    %cst_21 = arith.constant 1.275000e+01 : f32
    %66 = vector.broadcast %cst_21 : f32 to vector<24x128xf32>
    %67 = arith.cmpf oge, %65, %66 : vector<24x128xf32>
    %68 = arith.extui %67 : vector<24x128xi1> to vector<24x128xi32>
    %69 = arith.sitofp %68 : vector<24x128xi32> to vector<24x128xf32>
    %cst_22 = arith.constant 2.167500e+02 : f32
    %70 = vector.broadcast %cst_22 : f32 to vector<24x128xf32>
    %71 = arith.cmpf oge, %65, %70 : vector<24x128xf32>
    %72 = arith.extui %71 : vector<24x128xi1> to vector<24x128xi32>
    %73 = arith.sitofp %72 : vector<24x128xi32> to vector<24x128xf32>
    %74 = vector.shape_cast %73 : vector<24x128xf32> to vector<1x24x128xf32>
    %cst_23 = arith.constant dense<0.000000e+00> : vector<1xf32>
    %75 = vector.multi_reduction <add>, %74, %cst_23 [1, 2] : vector<1x24x128xf32> to vector<1xf32>
    %76 = vector.shape_cast %75 : vector<1xf32> to vector<1x1x1xf32>
    %77 = vector.extract %76[0, 0, 0] : f32 from vector<1x1x1xf32>
    %c0_i32 = arith.constant 0 : i32
    %c1_i32_24 = arith.constant 1 : i32
    %78:4 = scf.while (%arg2 = %c0_i32, %arg3 = %c1_i32_24, %arg4 = %73, %arg5 = %77) : (i32, i32, vector<24x128xf32>, f32) -> (i32, i32, vector<24x128xf32>, f32) {
      %c0_i32_44 = arith.constant 0 : i32
      %114 = arith.cmpi sgt, %arg3, %c0_i32_44 : i32
      %c17_i32 = arith.constant 17 : i32
      %115 = arith.cmpi slt, %arg2, %c17_i32 : i32
      %116 = arith.andi %114, %115 : i1
      scf.condition(%116) %arg2, %arg3, %arg4, %arg5 : i32, i32, vector<24x128xf32>, f32
    } do {
    ^bb0(%arg2: i32, %arg3: i32, %arg4: vector<24x128xf32>, %arg5: f32):
      %c127_i32_44 = arith.constant 127 : i32
      %114 = tpu.dynamic_rotate %arg4 by %c127_i32_44 dim 1 : vector<24x128xf32>, i32 -> vector<24x128xf32>
      %c1_i32_45 = arith.constant 1 : i32
      %115 = tpu.dynamic_rotate %arg4 by %c1_i32_45 dim 1 : vector<24x128xf32>, i32 -> vector<24x128xf32>
      %116 = arith.maximumf %114, %115 : vector<24x128xf32>
      %117 = arith.maximumf %arg4, %116 : vector<24x128xf32>
      %c23_i32_46 = arith.constant 23 : i32
      %118 = tpu.dynamic_rotate %117 by %c23_i32_46 dim 0 : vector<24x128xf32>, i32 -> vector<24x128xf32>
      %c1_i32_47 = arith.constant 1 : i32
      %119 = tpu.dynamic_rotate %117 by %c1_i32_47 dim 0 : vector<24x128xf32>, i32 -> vector<24x128xf32>
      %120 = arith.maximumf %118, %119 : vector<24x128xf32>
      %121 = arith.maximumf %117, %120 : vector<24x128xf32>
      %122 = arith.mulf %69, %121 : vector<24x128xf32>
      %c127_i32_48 = arith.constant 127 : i32
      %123 = tpu.dynamic_rotate %122 by %c127_i32_48 dim 1 : vector<24x128xf32>, i32 -> vector<24x128xf32>
      %c1_i32_49 = arith.constant 1 : i32
      %124 = tpu.dynamic_rotate %122 by %c1_i32_49 dim 1 : vector<24x128xf32>, i32 -> vector<24x128xf32>
      %125 = arith.maximumf %123, %124 : vector<24x128xf32>
      %126 = arith.maximumf %122, %125 : vector<24x128xf32>
      %c23_i32_50 = arith.constant 23 : i32
      %127 = tpu.dynamic_rotate %126 by %c23_i32_50 dim 0 : vector<24x128xf32>, i32 -> vector<24x128xf32>
      %c1_i32_51 = arith.constant 1 : i32
      %128 = tpu.dynamic_rotate %126 by %c1_i32_51 dim 0 : vector<24x128xf32>, i32 -> vector<24x128xf32>
      %129 = arith.maximumf %127, %128 : vector<24x128xf32>
      %130 = arith.maximumf %126, %129 : vector<24x128xf32>
      %131 = arith.mulf %69, %130 : vector<24x128xf32>
      %c127_i32_52 = arith.constant 127 : i32
      %132 = tpu.dynamic_rotate %131 by %c127_i32_52 dim 1 : vector<24x128xf32>, i32 -> vector<24x128xf32>
      %c1_i32_53 = arith.constant 1 : i32
      %133 = tpu.dynamic_rotate %131 by %c1_i32_53 dim 1 : vector<24x128xf32>, i32 -> vector<24x128xf32>
      %134 = arith.maximumf %132, %133 : vector<24x128xf32>
      %135 = arith.maximumf %131, %134 : vector<24x128xf32>
      %c23_i32_54 = arith.constant 23 : i32
      %136 = tpu.dynamic_rotate %135 by %c23_i32_54 dim 0 : vector<24x128xf32>, i32 -> vector<24x128xf32>
      %c1_i32_55 = arith.constant 1 : i32
      %137 = tpu.dynamic_rotate %135 by %c1_i32_55 dim 0 : vector<24x128xf32>, i32 -> vector<24x128xf32>
      %138 = arith.maximumf %136, %137 : vector<24x128xf32>
      %139 = arith.maximumf %135, %138 : vector<24x128xf32>
      %140 = arith.mulf %69, %139 : vector<24x128xf32>
      %c127_i32_56 = arith.constant 127 : i32
      %141 = tpu.dynamic_rotate %140 by %c127_i32_56 dim 1 : vector<24x128xf32>, i32 -> vector<24x128xf32>
      %c1_i32_57 = arith.constant 1 : i32
      %142 = tpu.dynamic_rotate %140 by %c1_i32_57 dim 1 : vector<24x128xf32>, i32 -> vector<24x128xf32>
      %143 = arith.maximumf %141, %142 : vector<24x128xf32>
      %144 = arith.maximumf %140, %143 : vector<24x128xf32>
      %c23_i32_58 = arith.constant 23 : i32
      %145 = tpu.dynamic_rotate %144 by %c23_i32_58 dim 0 : vector<24x128xf32>, i32 -> vector<24x128xf32>
      %c1_i32_59 = arith.constant 1 : i32
      %146 = tpu.dynamic_rotate %144 by %c1_i32_59 dim 0 : vector<24x128xf32>, i32 -> vector<24x128xf32>
      %147 = arith.maximumf %145, %146 : vector<24x128xf32>
      %148 = arith.maximumf %144, %147 : vector<24x128xf32>
      %149 = arith.mulf %69, %148 : vector<24x128xf32>
      %c127_i32_60 = arith.constant 127 : i32
      %150 = tpu.dynamic_rotate %149 by %c127_i32_60 dim 1 : vector<24x128xf32>, i32 -> vector<24x128xf32>
      %c1_i32_61 = arith.constant 1 : i32
      %151 = tpu.dynamic_rotate %149 by %c1_i32_61 dim 1 : vector<24x128xf32>, i32 -> vector<24x128xf32>
      %152 = arith.maximumf %150, %151 : vector<24x128xf32>
      %153 = arith.maximumf %149, %152 : vector<24x128xf32>
      %c23_i32_62 = arith.constant 23 : i32
      %154 = tpu.dynamic_rotate %153 by %c23_i32_62 dim 0 : vector<24x128xf32>, i32 -> vector<24x128xf32>
      %c1_i32_63 = arith.constant 1 : i32
      %155 = tpu.dynamic_rotate %153 by %c1_i32_63 dim 0 : vector<24x128xf32>, i32 -> vector<24x128xf32>
      %156 = arith.maximumf %154, %155 : vector<24x128xf32>
      %157 = arith.maximumf %153, %156 : vector<24x128xf32>
      %158 = arith.mulf %69, %157 : vector<24x128xf32>
      %c127_i32_64 = arith.constant 127 : i32
      %159 = tpu.dynamic_rotate %158 by %c127_i32_64 dim 1 : vector<24x128xf32>, i32 -> vector<24x128xf32>
      %c1_i32_65 = arith.constant 1 : i32
      %160 = tpu.dynamic_rotate %158 by %c1_i32_65 dim 1 : vector<24x128xf32>, i32 -> vector<24x128xf32>
      %161 = arith.maximumf %159, %160 : vector<24x128xf32>
      %162 = arith.maximumf %158, %161 : vector<24x128xf32>
      %c23_i32_66 = arith.constant 23 : i32
      %163 = tpu.dynamic_rotate %162 by %c23_i32_66 dim 0 : vector<24x128xf32>, i32 -> vector<24x128xf32>
      %c1_i32_67 = arith.constant 1 : i32
      %164 = tpu.dynamic_rotate %162 by %c1_i32_67 dim 0 : vector<24x128xf32>, i32 -> vector<24x128xf32>
      %165 = arith.maximumf %163, %164 : vector<24x128xf32>
      %166 = arith.maximumf %162, %165 : vector<24x128xf32>
      %167 = arith.mulf %69, %166 : vector<24x128xf32>
      %c127_i32_68 = arith.constant 127 : i32
      %168 = tpu.dynamic_rotate %167 by %c127_i32_68 dim 1 : vector<24x128xf32>, i32 -> vector<24x128xf32>
      %c1_i32_69 = arith.constant 1 : i32
      %169 = tpu.dynamic_rotate %167 by %c1_i32_69 dim 1 : vector<24x128xf32>, i32 -> vector<24x128xf32>
      %170 = arith.maximumf %168, %169 : vector<24x128xf32>
      %171 = arith.maximumf %167, %170 : vector<24x128xf32>
      %c23_i32_70 = arith.constant 23 : i32
      %172 = tpu.dynamic_rotate %171 by %c23_i32_70 dim 0 : vector<24x128xf32>, i32 -> vector<24x128xf32>
      %c1_i32_71 = arith.constant 1 : i32
      %173 = tpu.dynamic_rotate %171 by %c1_i32_71 dim 0 : vector<24x128xf32>, i32 -> vector<24x128xf32>
      %174 = arith.maximumf %172, %173 : vector<24x128xf32>
      %175 = arith.maximumf %171, %174 : vector<24x128xf32>
      %176 = arith.mulf %69, %175 : vector<24x128xf32>
      %c127_i32_72 = arith.constant 127 : i32
      %177 = tpu.dynamic_rotate %176 by %c127_i32_72 dim 1 : vector<24x128xf32>, i32 -> vector<24x128xf32>
      %c1_i32_73 = arith.constant 1 : i32
      %178 = tpu.dynamic_rotate %176 by %c1_i32_73 dim 1 : vector<24x128xf32>, i32 -> vector<24x128xf32>
      %179 = arith.maximumf %177, %178 : vector<24x128xf32>
      %180 = arith.maximumf %176, %179 : vector<24x128xf32>
      %c23_i32_74 = arith.constant 23 : i32
      %181 = tpu.dynamic_rotate %180 by %c23_i32_74 dim 0 : vector<24x128xf32>, i32 -> vector<24x128xf32>
      %c1_i32_75 = arith.constant 1 : i32
      %182 = tpu.dynamic_rotate %180 by %c1_i32_75 dim 0 : vector<24x128xf32>, i32 -> vector<24x128xf32>
      %183 = arith.maximumf %181, %182 : vector<24x128xf32>
      %184 = arith.maximumf %180, %183 : vector<24x128xf32>
      %185 = arith.mulf %69, %184 : vector<24x128xf32>
      %c127_i32_76 = arith.constant 127 : i32
      %186 = tpu.dynamic_rotate %185 by %c127_i32_76 dim 1 : vector<24x128xf32>, i32 -> vector<24x128xf32>
      %c1_i32_77 = arith.constant 1 : i32
      %187 = tpu.dynamic_rotate %185 by %c1_i32_77 dim 1 : vector<24x128xf32>, i32 -> vector<24x128xf32>
      %188 = arith.maximumf %186, %187 : vector<24x128xf32>
      %189 = arith.maximumf %185, %188 : vector<24x128xf32>
      %c23_i32_78 = arith.constant 23 : i32
      %190 = tpu.dynamic_rotate %189 by %c23_i32_78 dim 0 : vector<24x128xf32>, i32 -> vector<24x128xf32>
      %c1_i32_79 = arith.constant 1 : i32
      %191 = tpu.dynamic_rotate %189 by %c1_i32_79 dim 0 : vector<24x128xf32>, i32 -> vector<24x128xf32>
      %192 = arith.maximumf %190, %191 : vector<24x128xf32>
      %193 = arith.maximumf %189, %192 : vector<24x128xf32>
      %194 = arith.mulf %69, %193 : vector<24x128xf32>
      %c127_i32_80 = arith.constant 127 : i32
      %195 = tpu.dynamic_rotate %194 by %c127_i32_80 dim 1 : vector<24x128xf32>, i32 -> vector<24x128xf32>
      %c1_i32_81 = arith.constant 1 : i32
      %196 = tpu.dynamic_rotate %194 by %c1_i32_81 dim 1 : vector<24x128xf32>, i32 -> vector<24x128xf32>
      %197 = arith.maximumf %195, %196 : vector<24x128xf32>
      %198 = arith.maximumf %194, %197 : vector<24x128xf32>
      %c23_i32_82 = arith.constant 23 : i32
      %199 = tpu.dynamic_rotate %198 by %c23_i32_82 dim 0 : vector<24x128xf32>, i32 -> vector<24x128xf32>
      %c1_i32_83 = arith.constant 1 : i32
      %200 = tpu.dynamic_rotate %198 by %c1_i32_83 dim 0 : vector<24x128xf32>, i32 -> vector<24x128xf32>
      %201 = arith.maximumf %199, %200 : vector<24x128xf32>
      %202 = arith.maximumf %198, %201 : vector<24x128xf32>
      %203 = arith.mulf %69, %202 : vector<24x128xf32>
      %c127_i32_84 = arith.constant 127 : i32
      %204 = tpu.dynamic_rotate %203 by %c127_i32_84 dim 1 : vector<24x128xf32>, i32 -> vector<24x128xf32>
      %c1_i32_85 = arith.constant 1 : i32
      %205 = tpu.dynamic_rotate %203 by %c1_i32_85 dim 1 : vector<24x128xf32>, i32 -> vector<24x128xf32>
      %206 = arith.maximumf %204, %205 : vector<24x128xf32>
      %207 = arith.maximumf %203, %206 : vector<24x128xf32>
      %c23_i32_86 = arith.constant 23 : i32
      %208 = tpu.dynamic_rotate %207 by %c23_i32_86 dim 0 : vector<24x128xf32>, i32 -> vector<24x128xf32>
      %c1_i32_87 = arith.constant 1 : i32
      %209 = tpu.dynamic_rotate %207 by %c1_i32_87 dim 0 : vector<24x128xf32>, i32 -> vector<24x128xf32>
      %210 = arith.maximumf %208, %209 : vector<24x128xf32>
      %211 = arith.maximumf %207, %210 : vector<24x128xf32>
      %212 = arith.mulf %69, %211 : vector<24x128xf32>
      %c127_i32_88 = arith.constant 127 : i32
      %213 = tpu.dynamic_rotate %212 by %c127_i32_88 dim 1 : vector<24x128xf32>, i32 -> vector<24x128xf32>
      %c1_i32_89 = arith.constant 1 : i32
      %214 = tpu.dynamic_rotate %212 by %c1_i32_89 dim 1 : vector<24x128xf32>, i32 -> vector<24x128xf32>
      %215 = arith.maximumf %213, %214 : vector<24x128xf32>
      %216 = arith.maximumf %212, %215 : vector<24x128xf32>
      %c23_i32_90 = arith.constant 23 : i32
      %217 = tpu.dynamic_rotate %216 by %c23_i32_90 dim 0 : vector<24x128xf32>, i32 -> vector<24x128xf32>
      %c1_i32_91 = arith.constant 1 : i32
      %218 = tpu.dynamic_rotate %216 by %c1_i32_91 dim 0 : vector<24x128xf32>, i32 -> vector<24x128xf32>
      %219 = arith.maximumf %217, %218 : vector<24x128xf32>
      %220 = arith.maximumf %216, %219 : vector<24x128xf32>
      %221 = arith.mulf %69, %220 : vector<24x128xf32>
      %c127_i32_92 = arith.constant 127 : i32
      %222 = tpu.dynamic_rotate %221 by %c127_i32_92 dim 1 : vector<24x128xf32>, i32 -> vector<24x128xf32>
      %c1_i32_93 = arith.constant 1 : i32
      %223 = tpu.dynamic_rotate %221 by %c1_i32_93 dim 1 : vector<24x128xf32>, i32 -> vector<24x128xf32>
      %224 = arith.maximumf %222, %223 : vector<24x128xf32>
      %225 = arith.maximumf %221, %224 : vector<24x128xf32>
      %c23_i32_94 = arith.constant 23 : i32
      %226 = tpu.dynamic_rotate %225 by %c23_i32_94 dim 0 : vector<24x128xf32>, i32 -> vector<24x128xf32>
      %c1_i32_95 = arith.constant 1 : i32
      %227 = tpu.dynamic_rotate %225 by %c1_i32_95 dim 0 : vector<24x128xf32>, i32 -> vector<24x128xf32>
      %228 = arith.maximumf %226, %227 : vector<24x128xf32>
      %229 = arith.maximumf %225, %228 : vector<24x128xf32>
      %230 = arith.mulf %69, %229 : vector<24x128xf32>
      %c127_i32_96 = arith.constant 127 : i32
      %231 = tpu.dynamic_rotate %230 by %c127_i32_96 dim 1 : vector<24x128xf32>, i32 -> vector<24x128xf32>
      %c1_i32_97 = arith.constant 1 : i32
      %232 = tpu.dynamic_rotate %230 by %c1_i32_97 dim 1 : vector<24x128xf32>, i32 -> vector<24x128xf32>
      %233 = arith.maximumf %231, %232 : vector<24x128xf32>
      %234 = arith.maximumf %230, %233 : vector<24x128xf32>
      %c23_i32_98 = arith.constant 23 : i32
      %235 = tpu.dynamic_rotate %234 by %c23_i32_98 dim 0 : vector<24x128xf32>, i32 -> vector<24x128xf32>
      %c1_i32_99 = arith.constant 1 : i32
      %236 = tpu.dynamic_rotate %234 by %c1_i32_99 dim 0 : vector<24x128xf32>, i32 -> vector<24x128xf32>
      %237 = arith.maximumf %235, %236 : vector<24x128xf32>
      %238 = arith.maximumf %234, %237 : vector<24x128xf32>
      %239 = arith.mulf %69, %238 : vector<24x128xf32>
      %c127_i32_100 = arith.constant 127 : i32
      %240 = tpu.dynamic_rotate %239 by %c127_i32_100 dim 1 : vector<24x128xf32>, i32 -> vector<24x128xf32>
      %c1_i32_101 = arith.constant 1 : i32
      %241 = tpu.dynamic_rotate %239 by %c1_i32_101 dim 1 : vector<24x128xf32>, i32 -> vector<24x128xf32>
      %242 = arith.maximumf %240, %241 : vector<24x128xf32>
      %243 = arith.maximumf %239, %242 : vector<24x128xf32>
      %c23_i32_102 = arith.constant 23 : i32
      %244 = tpu.dynamic_rotate %243 by %c23_i32_102 dim 0 : vector<24x128xf32>, i32 -> vector<24x128xf32>
      %c1_i32_103 = arith.constant 1 : i32
      %245 = tpu.dynamic_rotate %243 by %c1_i32_103 dim 0 : vector<24x128xf32>, i32 -> vector<24x128xf32>
      %246 = arith.maximumf %244, %245 : vector<24x128xf32>
      %247 = arith.maximumf %243, %246 : vector<24x128xf32>
      %248 = arith.mulf %69, %247 : vector<24x128xf32>
      %c127_i32_104 = arith.constant 127 : i32
      %249 = tpu.dynamic_rotate %248 by %c127_i32_104 dim 1 : vector<24x128xf32>, i32 -> vector<24x128xf32>
      %c1_i32_105 = arith.constant 1 : i32
      %250 = tpu.dynamic_rotate %248 by %c1_i32_105 dim 1 : vector<24x128xf32>, i32 -> vector<24x128xf32>
      %251 = arith.maximumf %249, %250 : vector<24x128xf32>
      %252 = arith.maximumf %248, %251 : vector<24x128xf32>
      %c23_i32_106 = arith.constant 23 : i32
      %253 = tpu.dynamic_rotate %252 by %c23_i32_106 dim 0 : vector<24x128xf32>, i32 -> vector<24x128xf32>
      %c1_i32_107 = arith.constant 1 : i32
      %254 = tpu.dynamic_rotate %252 by %c1_i32_107 dim 0 : vector<24x128xf32>, i32 -> vector<24x128xf32>
      %255 = arith.maximumf %253, %254 : vector<24x128xf32>
      %256 = arith.maximumf %252, %255 : vector<24x128xf32>
      %257 = arith.mulf %69, %256 : vector<24x128xf32>
      %258 = vector.shape_cast %257 : vector<24x128xf32> to vector<1x24x128xf32>
      %cst_108 = arith.constant dense<0.000000e+00> : vector<1xf32>
      %259 = vector.multi_reduction <add>, %258, %cst_108 [1, 2] : vector<1x24x128xf32> to vector<1xf32>
      %260 = vector.shape_cast %259 : vector<1xf32> to vector<1x1x1xf32>
      %261 = vector.extract %260[0, 0, 0] : f32 from vector<1x1x1xf32>
      %c1_i32_109 = arith.constant 1 : i32
      %262 = arith.addi %arg2, %c1_i32_109 : i32
      %263 = arith.cmpf one, %261, %arg5 : f32
      %264 = arith.extui %263 : i1 to i32
      scf.yield %262, %264, %257, %261 : i32, i32, vector<24x128xf32>, f32
    }
    %c127_i32_25 = arith.constant 127 : i32
    %79 = tpu.dynamic_rotate %78#2 by %c127_i32_25 dim 1 : vector<24x128xf32>, i32 -> vector<24x128xf32>
    %c1_i32_26 = arith.constant 1 : i32
    %80 = tpu.dynamic_rotate %78#2 by %c1_i32_26 dim 1 : vector<24x128xf32>, i32 -> vector<24x128xf32>
    %81 = arith.maximumf %79, %80 : vector<24x128xf32>
    %82 = arith.maximumf %78#2, %81 : vector<24x128xf32>
    %c23_i32_27 = arith.constant 23 : i32
    %83 = tpu.dynamic_rotate %82 by %c23_i32_27 dim 0 : vector<24x128xf32>, i32 -> vector<24x128xf32>
    %c1_i32_28 = arith.constant 1 : i32
    %84 = tpu.dynamic_rotate %82 by %c1_i32_28 dim 0 : vector<24x128xf32>, i32 -> vector<24x128xf32>
    %85 = arith.maximumf %83, %84 : vector<24x128xf32>
    %86 = arith.maximumf %82, %85 : vector<24x128xf32>
    %cst_29 = arith.constant 1.000000e+00 : f32
    %87 = vector.broadcast %cst_29 : f32 to vector<24x128xf32>
    %88 = arith.select %30, %86, %87 : vector<24x128xi1>, vector<24x128xf32>
    %c127_i32_30 = arith.constant 127 : i32
    %89 = tpu.dynamic_rotate %88 by %c127_i32_30 dim 1 : vector<24x128xf32>, i32 -> vector<24x128xf32>
    %c1_i32_31 = arith.constant 1 : i32
    %90 = tpu.dynamic_rotate %88 by %c1_i32_31 dim 1 : vector<24x128xf32>, i32 -> vector<24x128xf32>
    %91 = arith.minimumf %89, %90 : vector<24x128xf32>
    %92 = arith.minimumf %88, %91 : vector<24x128xf32>
    %c23_i32_32 = arith.constant 23 : i32
    %93 = tpu.dynamic_rotate %92 by %c23_i32_32 dim 0 : vector<24x128xf32>, i32 -> vector<24x128xf32>
    %c1_i32_33 = arith.constant 1 : i32
    %94 = tpu.dynamic_rotate %92 by %c1_i32_33 dim 0 : vector<24x128xf32>, i32 -> vector<24x128xf32>
    %95 = arith.minimumf %93, %94 : vector<24x128xf32>
    %96 = arith.minimumf %92, %95 : vector<24x128xf32>
    %cst_34 = arith.constant 5.000000e-01 : f32
    %97 = vector.broadcast %cst_34 : f32 to vector<24x128xf32>
    %98 = arith.cmpf ogt, %96, %97 : vector<24x128xf32>
    %99 = arith.andi %98, %30 : vector<24x128xi1>
    %c16_i32_35 = arith.constant 16 : i32
    %100 = vector.broadcast %c16_i32_35 : i32 to vector<24x128xi32>
    %101 = arith.muli %24, %100 : vector<24x128xi32>
    %102 = arith.addi %101, %25 : vector<24x128xi32>
    %c1_i32_36 = arith.constant 1 : i32
    %103 = vector.broadcast %c1_i32_36 : i32 to vector<24x128xi32>
    %104 = arith.addi %102, %103 : vector<24x128xi32>
    %c0_i32_37 = arith.constant 0 : i32
    %c1073741824_i32 = arith.constant 1073741824 : i32
    %105 = vector.broadcast %c0_i32_37 : i32 to vector<24x128xi32>
    %106 = vector.broadcast %c1073741824_i32 : i32 to vector<24x128xi32>
    %107 = arith.select %99, %105, %106 : vector<24x128xi1>, vector<24x128xi32>
    %c1073741824_i32_38 = arith.constant 1073741824 : i32
    %108 = vector.broadcast %c1073741824_i32_38 : i32 to vector<24x128xi32>
    %109 = arith.select %99, %104, %108 : vector<24x128xi1>, vector<24x128xi32>
    %c0_i32_39 = arith.constant 0 : i32
    %c1_i32_40 = arith.constant 1 : i32
    %110:3 = scf.while (%arg2 = %c0_i32_39, %arg3 = %c1_i32_40, %arg4 = %109) : (i32, i32, vector<24x128xi32>) -> (i32, i32, vector<24x128xi32>) {
      %c0_i32_44 = arith.constant 0 : i32
      %114 = arith.cmpi sgt, %arg3, %c0_i32_44 : i32
      %c17_i32 = arith.constant 17 : i32
      %115 = arith.cmpi slt, %arg2, %c17_i32 : i32
      %116 = arith.andi %114, %115 : i1
      scf.condition(%116) %arg2, %arg3, %arg4 : i32, i32, vector<24x128xi32>
    } do {
    ^bb0(%arg2: i32, %arg3: i32, %arg4: vector<24x128xi32>):
      %c127_i32_44 = arith.constant 127 : i32
      %114 = tpu.dynamic_rotate %arg4 by %c127_i32_44 dim 1 : vector<24x128xi32>, i32 -> vector<24x128xi32>
      %c1_i32_45 = arith.constant 1 : i32
      %115 = tpu.dynamic_rotate %arg4 by %c1_i32_45 dim 1 : vector<24x128xi32>, i32 -> vector<24x128xi32>
      %116 = arith.minsi %114, %115 : vector<24x128xi32>
      %117 = arith.minsi %arg4, %116 : vector<24x128xi32>
      %c23_i32_46 = arith.constant 23 : i32
      %118 = tpu.dynamic_rotate %117 by %c23_i32_46 dim 0 : vector<24x128xi32>, i32 -> vector<24x128xi32>
      %c1_i32_47 = arith.constant 1 : i32
      %119 = tpu.dynamic_rotate %117 by %c1_i32_47 dim 0 : vector<24x128xi32>, i32 -> vector<24x128xi32>
      %120 = arith.minsi %118, %119 : vector<24x128xi32>
      %121 = arith.minsi %117, %120 : vector<24x128xi32>
      %122 = arith.maxsi %121, %107 : vector<24x128xi32>
      %c127_i32_48 = arith.constant 127 : i32
      %123 = tpu.dynamic_rotate %122 by %c127_i32_48 dim 1 : vector<24x128xi32>, i32 -> vector<24x128xi32>
      %c1_i32_49 = arith.constant 1 : i32
      %124 = tpu.dynamic_rotate %122 by %c1_i32_49 dim 1 : vector<24x128xi32>, i32 -> vector<24x128xi32>
      %125 = arith.minsi %123, %124 : vector<24x128xi32>
      %126 = arith.minsi %122, %125 : vector<24x128xi32>
      %c23_i32_50 = arith.constant 23 : i32
      %127 = tpu.dynamic_rotate %126 by %c23_i32_50 dim 0 : vector<24x128xi32>, i32 -> vector<24x128xi32>
      %c1_i32_51 = arith.constant 1 : i32
      %128 = tpu.dynamic_rotate %126 by %c1_i32_51 dim 0 : vector<24x128xi32>, i32 -> vector<24x128xi32>
      %129 = arith.minsi %127, %128 : vector<24x128xi32>
      %130 = arith.minsi %126, %129 : vector<24x128xi32>
      %131 = arith.maxsi %130, %107 : vector<24x128xi32>
      %c127_i32_52 = arith.constant 127 : i32
      %132 = tpu.dynamic_rotate %131 by %c127_i32_52 dim 1 : vector<24x128xi32>, i32 -> vector<24x128xi32>
      %c1_i32_53 = arith.constant 1 : i32
      %133 = tpu.dynamic_rotate %131 by %c1_i32_53 dim 1 : vector<24x128xi32>, i32 -> vector<24x128xi32>
      %134 = arith.minsi %132, %133 : vector<24x128xi32>
      %135 = arith.minsi %131, %134 : vector<24x128xi32>
      %c23_i32_54 = arith.constant 23 : i32
      %136 = tpu.dynamic_rotate %135 by %c23_i32_54 dim 0 : vector<24x128xi32>, i32 -> vector<24x128xi32>
      %c1_i32_55 = arith.constant 1 : i32
      %137 = tpu.dynamic_rotate %135 by %c1_i32_55 dim 0 : vector<24x128xi32>, i32 -> vector<24x128xi32>
      %138 = arith.minsi %136, %137 : vector<24x128xi32>
      %139 = arith.minsi %135, %138 : vector<24x128xi32>
      %140 = arith.maxsi %139, %107 : vector<24x128xi32>
      %c127_i32_56 = arith.constant 127 : i32
      %141 = tpu.dynamic_rotate %140 by %c127_i32_56 dim 1 : vector<24x128xi32>, i32 -> vector<24x128xi32>
      %c1_i32_57 = arith.constant 1 : i32
      %142 = tpu.dynamic_rotate %140 by %c1_i32_57 dim 1 : vector<24x128xi32>, i32 -> vector<24x128xi32>
      %143 = arith.minsi %141, %142 : vector<24x128xi32>
      %144 = arith.minsi %140, %143 : vector<24x128xi32>
      %c23_i32_58 = arith.constant 23 : i32
      %145 = tpu.dynamic_rotate %144 by %c23_i32_58 dim 0 : vector<24x128xi32>, i32 -> vector<24x128xi32>
      %c1_i32_59 = arith.constant 1 : i32
      %146 = tpu.dynamic_rotate %144 by %c1_i32_59 dim 0 : vector<24x128xi32>, i32 -> vector<24x128xi32>
      %147 = arith.minsi %145, %146 : vector<24x128xi32>
      %148 = arith.minsi %144, %147 : vector<24x128xi32>
      %149 = arith.maxsi %148, %107 : vector<24x128xi32>
      %c127_i32_60 = arith.constant 127 : i32
      %150 = tpu.dynamic_rotate %149 by %c127_i32_60 dim 1 : vector<24x128xi32>, i32 -> vector<24x128xi32>
      %c1_i32_61 = arith.constant 1 : i32
      %151 = tpu.dynamic_rotate %149 by %c1_i32_61 dim 1 : vector<24x128xi32>, i32 -> vector<24x128xi32>
      %152 = arith.minsi %150, %151 : vector<24x128xi32>
      %153 = arith.minsi %149, %152 : vector<24x128xi32>
      %c23_i32_62 = arith.constant 23 : i32
      %154 = tpu.dynamic_rotate %153 by %c23_i32_62 dim 0 : vector<24x128xi32>, i32 -> vector<24x128xi32>
      %c1_i32_63 = arith.constant 1 : i32
      %155 = tpu.dynamic_rotate %153 by %c1_i32_63 dim 0 : vector<24x128xi32>, i32 -> vector<24x128xi32>
      %156 = arith.minsi %154, %155 : vector<24x128xi32>
      %157 = arith.minsi %153, %156 : vector<24x128xi32>
      %158 = arith.maxsi %157, %107 : vector<24x128xi32>
      %c127_i32_64 = arith.constant 127 : i32
      %159 = tpu.dynamic_rotate %158 by %c127_i32_64 dim 1 : vector<24x128xi32>, i32 -> vector<24x128xi32>
      %c1_i32_65 = arith.constant 1 : i32
      %160 = tpu.dynamic_rotate %158 by %c1_i32_65 dim 1 : vector<24x128xi32>, i32 -> vector<24x128xi32>
      %161 = arith.minsi %159, %160 : vector<24x128xi32>
      %162 = arith.minsi %158, %161 : vector<24x128xi32>
      %c23_i32_66 = arith.constant 23 : i32
      %163 = tpu.dynamic_rotate %162 by %c23_i32_66 dim 0 : vector<24x128xi32>, i32 -> vector<24x128xi32>
      %c1_i32_67 = arith.constant 1 : i32
      %164 = tpu.dynamic_rotate %162 by %c1_i32_67 dim 0 : vector<24x128xi32>, i32 -> vector<24x128xi32>
      %165 = arith.minsi %163, %164 : vector<24x128xi32>
      %166 = arith.minsi %162, %165 : vector<24x128xi32>
      %167 = arith.maxsi %166, %107 : vector<24x128xi32>
      %c127_i32_68 = arith.constant 127 : i32
      %168 = tpu.dynamic_rotate %167 by %c127_i32_68 dim 1 : vector<24x128xi32>, i32 -> vector<24x128xi32>
      %c1_i32_69 = arith.constant 1 : i32
      %169 = tpu.dynamic_rotate %167 by %c1_i32_69 dim 1 : vector<24x128xi32>, i32 -> vector<24x128xi32>
      %170 = arith.minsi %168, %169 : vector<24x128xi32>
      %171 = arith.minsi %167, %170 : vector<24x128xi32>
      %c23_i32_70 = arith.constant 23 : i32
      %172 = tpu.dynamic_rotate %171 by %c23_i32_70 dim 0 : vector<24x128xi32>, i32 -> vector<24x128xi32>
      %c1_i32_71 = arith.constant 1 : i32
      %173 = tpu.dynamic_rotate %171 by %c1_i32_71 dim 0 : vector<24x128xi32>, i32 -> vector<24x128xi32>
      %174 = arith.minsi %172, %173 : vector<24x128xi32>
      %175 = arith.minsi %171, %174 : vector<24x128xi32>
      %176 = arith.maxsi %175, %107 : vector<24x128xi32>
      %c127_i32_72 = arith.constant 127 : i32
      %177 = tpu.dynamic_rotate %176 by %c127_i32_72 dim 1 : vector<24x128xi32>, i32 -> vector<24x128xi32>
      %c1_i32_73 = arith.constant 1 : i32
      %178 = tpu.dynamic_rotate %176 by %c1_i32_73 dim 1 : vector<24x128xi32>, i32 -> vector<24x128xi32>
      %179 = arith.minsi %177, %178 : vector<24x128xi32>
      %180 = arith.minsi %176, %179 : vector<24x128xi32>
      %c23_i32_74 = arith.constant 23 : i32
      %181 = tpu.dynamic_rotate %180 by %c23_i32_74 dim 0 : vector<24x128xi32>, i32 -> vector<24x128xi32>
      %c1_i32_75 = arith.constant 1 : i32
      %182 = tpu.dynamic_rotate %180 by %c1_i32_75 dim 0 : vector<24x128xi32>, i32 -> vector<24x128xi32>
      %183 = arith.minsi %181, %182 : vector<24x128xi32>
      %184 = arith.minsi %180, %183 : vector<24x128xi32>
      %185 = arith.maxsi %184, %107 : vector<24x128xi32>
      %c127_i32_76 = arith.constant 127 : i32
      %186 = tpu.dynamic_rotate %185 by %c127_i32_76 dim 1 : vector<24x128xi32>, i32 -> vector<24x128xi32>
      %c1_i32_77 = arith.constant 1 : i32
      %187 = tpu.dynamic_rotate %185 by %c1_i32_77 dim 1 : vector<24x128xi32>, i32 -> vector<24x128xi32>
      %188 = arith.minsi %186, %187 : vector<24x128xi32>
      %189 = arith.minsi %185, %188 : vector<24x128xi32>
      %c23_i32_78 = arith.constant 23 : i32
      %190 = tpu.dynamic_rotate %189 by %c23_i32_78 dim 0 : vector<24x128xi32>, i32 -> vector<24x128xi32>
      %c1_i32_79 = arith.constant 1 : i32
      %191 = tpu.dynamic_rotate %189 by %c1_i32_79 dim 0 : vector<24x128xi32>, i32 -> vector<24x128xi32>
      %192 = arith.minsi %190, %191 : vector<24x128xi32>
      %193 = arith.minsi %189, %192 : vector<24x128xi32>
      %194 = arith.maxsi %193, %107 : vector<24x128xi32>
      %c127_i32_80 = arith.constant 127 : i32
      %195 = tpu.dynamic_rotate %194 by %c127_i32_80 dim 1 : vector<24x128xi32>, i32 -> vector<24x128xi32>
      %c1_i32_81 = arith.constant 1 : i32
      %196 = tpu.dynamic_rotate %194 by %c1_i32_81 dim 1 : vector<24x128xi32>, i32 -> vector<24x128xi32>
      %197 = arith.minsi %195, %196 : vector<24x128xi32>
      %198 = arith.minsi %194, %197 : vector<24x128xi32>
      %c23_i32_82 = arith.constant 23 : i32
      %199 = tpu.dynamic_rotate %198 by %c23_i32_82 dim 0 : vector<24x128xi32>, i32 -> vector<24x128xi32>
      %c1_i32_83 = arith.constant 1 : i32
      %200 = tpu.dynamic_rotate %198 by %c1_i32_83 dim 0 : vector<24x128xi32>, i32 -> vector<24x128xi32>
      %201 = arith.minsi %199, %200 : vector<24x128xi32>
      %202 = arith.minsi %198, %201 : vector<24x128xi32>
      %203 = arith.maxsi %202, %107 : vector<24x128xi32>
      %c127_i32_84 = arith.constant 127 : i32
      %204 = tpu.dynamic_rotate %203 by %c127_i32_84 dim 1 : vector<24x128xi32>, i32 -> vector<24x128xi32>
      %c1_i32_85 = arith.constant 1 : i32
      %205 = tpu.dynamic_rotate %203 by %c1_i32_85 dim 1 : vector<24x128xi32>, i32 -> vector<24x128xi32>
      %206 = arith.minsi %204, %205 : vector<24x128xi32>
      %207 = arith.minsi %203, %206 : vector<24x128xi32>
      %c23_i32_86 = arith.constant 23 : i32
      %208 = tpu.dynamic_rotate %207 by %c23_i32_86 dim 0 : vector<24x128xi32>, i32 -> vector<24x128xi32>
      %c1_i32_87 = arith.constant 1 : i32
      %209 = tpu.dynamic_rotate %207 by %c1_i32_87 dim 0 : vector<24x128xi32>, i32 -> vector<24x128xi32>
      %210 = arith.minsi %208, %209 : vector<24x128xi32>
      %211 = arith.minsi %207, %210 : vector<24x128xi32>
      %212 = arith.maxsi %211, %107 : vector<24x128xi32>
      %c127_i32_88 = arith.constant 127 : i32
      %213 = tpu.dynamic_rotate %212 by %c127_i32_88 dim 1 : vector<24x128xi32>, i32 -> vector<24x128xi32>
      %c1_i32_89 = arith.constant 1 : i32
      %214 = tpu.dynamic_rotate %212 by %c1_i32_89 dim 1 : vector<24x128xi32>, i32 -> vector<24x128xi32>
      %215 = arith.minsi %213, %214 : vector<24x128xi32>
      %216 = arith.minsi %212, %215 : vector<24x128xi32>
      %c23_i32_90 = arith.constant 23 : i32
      %217 = tpu.dynamic_rotate %216 by %c23_i32_90 dim 0 : vector<24x128xi32>, i32 -> vector<24x128xi32>
      %c1_i32_91 = arith.constant 1 : i32
      %218 = tpu.dynamic_rotate %216 by %c1_i32_91 dim 0 : vector<24x128xi32>, i32 -> vector<24x128xi32>
      %219 = arith.minsi %217, %218 : vector<24x128xi32>
      %220 = arith.minsi %216, %219 : vector<24x128xi32>
      %221 = arith.maxsi %220, %107 : vector<24x128xi32>
      %c127_i32_92 = arith.constant 127 : i32
      %222 = tpu.dynamic_rotate %221 by %c127_i32_92 dim 1 : vector<24x128xi32>, i32 -> vector<24x128xi32>
      %c1_i32_93 = arith.constant 1 : i32
      %223 = tpu.dynamic_rotate %221 by %c1_i32_93 dim 1 : vector<24x128xi32>, i32 -> vector<24x128xi32>
      %224 = arith.minsi %222, %223 : vector<24x128xi32>
      %225 = arith.minsi %221, %224 : vector<24x128xi32>
      %c23_i32_94 = arith.constant 23 : i32
      %226 = tpu.dynamic_rotate %225 by %c23_i32_94 dim 0 : vector<24x128xi32>, i32 -> vector<24x128xi32>
      %c1_i32_95 = arith.constant 1 : i32
      %227 = tpu.dynamic_rotate %225 by %c1_i32_95 dim 0 : vector<24x128xi32>, i32 -> vector<24x128xi32>
      %228 = arith.minsi %226, %227 : vector<24x128xi32>
      %229 = arith.minsi %225, %228 : vector<24x128xi32>
      %230 = arith.maxsi %229, %107 : vector<24x128xi32>
      %c127_i32_96 = arith.constant 127 : i32
      %231 = tpu.dynamic_rotate %230 by %c127_i32_96 dim 1 : vector<24x128xi32>, i32 -> vector<24x128xi32>
      %c1_i32_97 = arith.constant 1 : i32
      %232 = tpu.dynamic_rotate %230 by %c1_i32_97 dim 1 : vector<24x128xi32>, i32 -> vector<24x128xi32>
      %233 = arith.minsi %231, %232 : vector<24x128xi32>
      %234 = arith.minsi %230, %233 : vector<24x128xi32>
      %c23_i32_98 = arith.constant 23 : i32
      %235 = tpu.dynamic_rotate %234 by %c23_i32_98 dim 0 : vector<24x128xi32>, i32 -> vector<24x128xi32>
      %c1_i32_99 = arith.constant 1 : i32
      %236 = tpu.dynamic_rotate %234 by %c1_i32_99 dim 0 : vector<24x128xi32>, i32 -> vector<24x128xi32>
      %237 = arith.minsi %235, %236 : vector<24x128xi32>
      %238 = arith.minsi %234, %237 : vector<24x128xi32>
      %239 = arith.maxsi %238, %107 : vector<24x128xi32>
      %c127_i32_100 = arith.constant 127 : i32
      %240 = tpu.dynamic_rotate %239 by %c127_i32_100 dim 1 : vector<24x128xi32>, i32 -> vector<24x128xi32>
      %c1_i32_101 = arith.constant 1 : i32
      %241 = tpu.dynamic_rotate %239 by %c1_i32_101 dim 1 : vector<24x128xi32>, i32 -> vector<24x128xi32>
      %242 = arith.minsi %240, %241 : vector<24x128xi32>
      %243 = arith.minsi %239, %242 : vector<24x128xi32>
      %c23_i32_102 = arith.constant 23 : i32
      %244 = tpu.dynamic_rotate %243 by %c23_i32_102 dim 0 : vector<24x128xi32>, i32 -> vector<24x128xi32>
      %c1_i32_103 = arith.constant 1 : i32
      %245 = tpu.dynamic_rotate %243 by %c1_i32_103 dim 0 : vector<24x128xi32>, i32 -> vector<24x128xi32>
      %246 = arith.minsi %244, %245 : vector<24x128xi32>
      %247 = arith.minsi %243, %246 : vector<24x128xi32>
      %248 = arith.maxsi %247, %107 : vector<24x128xi32>
      %c127_i32_104 = arith.constant 127 : i32
      %249 = tpu.dynamic_rotate %248 by %c127_i32_104 dim 1 : vector<24x128xi32>, i32 -> vector<24x128xi32>
      %c1_i32_105 = arith.constant 1 : i32
      %250 = tpu.dynamic_rotate %248 by %c1_i32_105 dim 1 : vector<24x128xi32>, i32 -> vector<24x128xi32>
      %251 = arith.minsi %249, %250 : vector<24x128xi32>
      %252 = arith.minsi %248, %251 : vector<24x128xi32>
      %c23_i32_106 = arith.constant 23 : i32
      %253 = tpu.dynamic_rotate %252 by %c23_i32_106 dim 0 : vector<24x128xi32>, i32 -> vector<24x128xi32>
      %c1_i32_107 = arith.constant 1 : i32
      %254 = tpu.dynamic_rotate %252 by %c1_i32_107 dim 0 : vector<24x128xi32>, i32 -> vector<24x128xi32>
      %255 = arith.minsi %253, %254 : vector<24x128xi32>
      %256 = arith.minsi %252, %255 : vector<24x128xi32>
      %257 = arith.maxsi %256, %107 : vector<24x128xi32>
      %258 = arith.cmpi ne, %257, %arg4 : vector<24x128xi32>
      %259 = arith.extui %258 : vector<24x128xi1> to vector<24x128xi32>
      %260 = vector.shape_cast %259 : vector<24x128xi32> to vector<1x24x128xi32>
      %cst_108 = arith.constant dense<0> : vector<1xi32>
      %261 = vector.multi_reduction <add>, %260, %cst_108 [1, 2] : vector<1x24x128xi32> to vector<1xi32>
      %262 = vector.shape_cast %261 : vector<1xi32> to vector<1x1x1xi32>
      %263 = vector.extract %262[0, 0, 0] : i32 from vector<1x1x1xi32>
      %c1_i32_109 = arith.constant 1 : i32
      %264 = arith.addi %arg2, %c1_i32_109 : i32
      scf.yield %264, %263, %257 : i32, i32, vector<24x128xi32>
    }
    %c0_i32_41 = arith.constant 0 : i32
    %111 = vector.broadcast %c0_i32_41 : i32 to vector<24x128xi32>
    %112 = arith.select %99, %110#2, %111 : vector<24x128xi1>, vector<24x128xi32>
    %c0_42 = arith.constant 0 : index
    %c0_43 = arith.constant 0 : index
    %113 = vector.load %arg1[%c0_42, %c0_43] : memref<24x128xi32, #tpu.memory_space<vmem>>, vector<24x128xi32>
    tpu.vector_store %arg1[%c0_42, %c0_43], %112 {strides = array<i32>} : memref<24x128xi32, #tpu.memory_space<vmem>>, vector<24x128xi32>,
    return
  }
}

</mosaic_0001>

<llo_original>
// kernel: canny_forward.1
$region0: #{canny_forward.1}
  #allocation0 [shape = 'u32[]', space=smem, size = 0x4, offset = 0x4, fixed_abs, tag = 'smem constant byte address 0x4 - core index']
  #allocation1 [shape = 'u32[144,128]{1,0:T(1,128)}', space=vmem, size = 0x12000, scoped, tag = 'internal scratch']
  %s0 = inlined_call_operand.vmem [shape: u8[24,128], index: 0, kind: input, shape index: {}]
  %s1 = inlined_call_operand.vmem [shape: s32[24,128], index: 1, kind: output, shape index: {}]
  %s2 = sld [smem:[#allocation0]]
  $region28: #{canny_forward.1} parent=0
    _
  %s4 = ssub.s32 1, %s2
  %s5 = scalar_select 0, %s4, %s2
  // Predicated region
  $region2: #{canny_forward.1} parent=0 // pred_check
    _
  $region3: #{canny_forward.1} parent=0 // pred_check_branch
    %7 = sbr.rel (0) target = $region5
  $region4: #{canny_forward.1} parent=0 // pred_region
    _
  $region5: #{canny_forward.1} parent=0 // pred_fallthru
    _
  %v8 = vld [vmem:[%s0] sm:$0x3]
  %v9 = vld [vmem:[%s0 + $0x2] sm:$0x3]
  %v10 = vld [vmem:[%s0 + $0x4] sm:$0x3]
  %v11 = vunpack.c.0.s8 %v8
  %v12 = vunpack.c.0.s8 %v9
  %v13 = vunpack.c.0.s8 %v10
  %v14 = vand.u32 %v11, 255
  %v15 = vand.u32 %v12, 255
  %v16 = vand.u32 %v13, 255
  %v17 = vcvt.s32.f32 %v14
  %v18 = vcvt.s32.f32 %v15
  %v19 = vcvt.s32.f32 %v16
  %20 = vrot.lane.b32.xlu0 %v17, 127
  %v21 = vpop.permute.xlu0 %20
  %22 = vrot.lane.b32.xlu0 %v18, 127
  %v23 = vpop.permute.xlu0 %22
  %24 = vrot.lane.b32.xlu0 %v19, 127
  %v25 = vpop.permute.xlu0 %24
  %26 = vrot.lane.b32.xlu0 %v17, 1
  %v27 = vpop.permute.xlu0 %26
  %28 = vrot.lane.b32.xlu0 %v18, 1
  %v29 = vpop.permute.xlu0 %28
  %30 = vrot.lane.b32.xlu0 %v19, 1
  %v31 = vpop.permute.xlu0 %30
  %v32 = vrot.slane %v17, 7
  %v33 = vrot.slane %v18, 7
  %v34 = vrot.slane %v19, 7
  %v35 = vlaneseq
  %v36 = vshrl.u32 %v35, 7
  %vm37 = vcmp.lt.s32.totalorder %v36, 1
  %v38 = vsel %vm37, %v33, %v34
  %v39 = vsel %vm37, %v32, %v33
  %v40 = vsel %vm37, %v34, %v32
  %v41 = vrot.slane %v17, 1
  %v42 = vrot.slane %v18, 1
  %v43 = vrot.slane %v19, 1
  %vm44 = vcmp.lt.s32.totalorder %v36, 7
  %v45 = vsel %vm44, %v42, %v43
  %v46 = vsel %vm44, %v41, %v42
  %v47 = vsel %vm44, %v43, %v41
  %v48 = vrot.slane %v21, 7
  %v49 = vrot.slane %v23, 7
  %v50 = vrot.slane %v25, 7
  %v51 = vsel %vm37, %v49, %v50
  %v52 = vsel %vm37, %v48, %v49
  %v53 = vsel %vm37, %v50, %v48
  %v54 = vrot.slane %v21, 1
  %v55 = vrot.slane %v23, 1
  %v56 = vrot.slane %v25, 1
  %v57 = vsel %vm44, %v55, %v56
  %v58 = vsel %vm44, %v54, %v55
  %v59 = vsel %vm44, %v56, %v54
  %v60 = vrot.slane %v27, 7
  %v61 = vrot.slane %v29, 7
  %v62 = vrot.slane %v31, 7
  %v63 = vsel %vm37, %v61, %v62
  %v64 = vsel %vm37, %v60, %v61
  %v65 = vsel %vm37, %v62, %v60
  %v66 = vrot.slane %v27, 1
  %v67 = vrot.slane %v29, 1
  %v68 = vrot.slane %v31, 1
  %v69 = vsel %vm44, %v67, %v68
  %v70 = vsel %vm44, %v66, %v67
  %v71 = vsel %vm44, %v68, %v66
  %v72 = vsub.f32 %v53, %v65
  %v73 = vsub.f32 %v52, %v64
  %v74 = vsub.f32 %v51, %v63
  %v75 = vsub.f32 %v21, %v27
  %v76 = vsub.f32 %v23, %v29
  %v77 = vsub.f32 %v25, %v31
  %v78 = vmul.f32 %v75, 2.0
  %v79 = vmul.f32 %v76, 2.0
  %v80 = vmul.f32 %v77, 2.0
  %v81 = vadd.f32 %v72, %v78
  %v82 = vadd.f32 %v73, %v79
  %v83 = vadd.f32 %v74, %v80
  %v84 = vsub.f32 %v58, %v70
  %v85 = vsub.f32 %v57, %v69
  %v86 = vsub.f32 %v59, %v71
  %v87 = vadd.f32 %v81, %v84
  %v88 = vadd.f32 %v82, %v85
  %v89 = vadd.f32 %v83, %v86
  %v90 = vsub.f32 %v70, %v65
  %v91 = vsub.f32 %v69, %v64
  %v92 = vsub.f32 %v71, %v63
  %v93 = vsub.f32 %v46, %v40
  %v94 = vsub.f32 %v45, %v39
  %v95 = vsub.f32 %v47, %v38
  %v96 = vmul.f32 %v93, 2.0
  %v97 = vmul.f32 %v94, 2.0
  %v98 = vmul.f32 %v95, 2.0
  %v99 = vadd.f32 %v90, %v96
  %v100 = vadd.f32 %v91, %v97
  %v101 = vadd.f32 %v92, %v98
  %v102 = vsub.f32 %v58, %v53
  %v103 = vsub.f32 %v57, %v52
  %v104 = vsub.f32 %v59, %v51
  %v105 = vadd.f32 %v99, %v102
  %v106 = vadd.f32 %v100, %v103
  %v107 = vadd.f32 %v101, %v104
  %v108 = vadd.s32 %v36, 8
  %v109 = vadd.s32 %v36, 16
  %v110 = vlaneseq
  %v111 = vand.u32 %v110, 127
  %vm112 = vcmp.lt.s32.totalorder %v36, 16
  %vm113 = vcmp.lt.s32.totalorder %v108, 16
  %vm114 = vcmp.lt.s32.totalorder %v109, 16
  %vm115 = vcmp.lt.s32.totalorder %v111, 16
  %vm116 = vmand %vm112, %vm115
  %vm117 = vmand %vm113, %vm115
  %vm118 = vmand %vm114, %vm115
  %v119 = vand.u32 2147483647, %v87
  %v120 = vand.u32 2147483647, %v88
  %v121 = vand.u32 2147483647, %v89
  %v122 = vand.u32 2147483647, %v105
  %v123 = vand.u32 2147483647, %v106
  %v124 = vand.u32 2147483647, %v107
  %v125 = vadd.f32 %v119, %v122
  %v126 = vadd.f32 %v120, %v123
  %v127 = vadd.f32 %v121, %v124
  %v128 = vsel %vm116, %v125, 0.0
  %v129 = vsel %vm117, %v126, 0.0
  %v130 = vsel %vm118, %v127, 0.0
  %131 = vrot.lane.b32.xlu0 %v128, 127
  %v132 = vpop.permute.xlu0 %131
  %133 = vrot.lane.b32.xlu0 %v129, 127
  %v134 = vpop.permute.xlu0 %133
  %135 = vrot.lane.b32.xlu0 %v130, 127
  %v136 = vpop.permute.xlu0 %135
  %137 = vrot.lane.b32.xlu0 %v128, 1
  %v138 = vpop.permute.xlu0 %137
  %139 = vrot.lane.b32.xlu0 %v129, 1
  %v140 = vpop.permute.xlu0 %139
  %141 = vrot.lane.b32.xlu0 %v130, 1
  %v142 = vpop.permute.xlu0 %141
  %v143 = vrot.slane %v128, 7
  %v144 = vrot.slane %v129, 7
  %v145 = vrot.slane %v130, 7
  %v146 = vsel %vm37, %v144, %v145
  %v147 = vsel %vm37, %v143, %v144
  %v148 = vsel %vm37, %v145, %v143
  %v149 = vrot.slane %v128, 1
  %v150 = vrot.slane %v129, 1
  %v151 = vrot.slane %v130, 1
  %v152 = vsel %vm44, %v150, %v151
  %v153 = vsel %vm44, %v149, %v150
  %v154 = vsel %vm44, %v151, %v149
  %v155 = vrot.slane %v132, 7
  %v156 = vrot.slane %v134, 7
  %v157 = vrot.slane %v136, 7
  %v158 = vsel %vm37, %v156, %v157
  %v159 = vsel %vm37, %v155, %v156
  %v160 = vsel %vm37, %v157, %v155
  %v161 = vrot.slane %v132, 1
  %v162 = vrot.slane %v134, 1
  %v163 = vrot.slane %v136, 1
  %v164 = vsel %vm44, %v162, %v163
  %v165 = vsel %vm44, %v161, %v162
  %v166 = vsel %vm44, %v163, %v161
  %v167 = vrot.slane %v138, 7
  %v168 = vrot.slane %v140, 7
  %v169 = vrot.slane %v142, 7
  %v170 = vsel %vm37, %v168, %v169
  %v171 = vsel %vm37, %v167, %v168
  %v172 = vsel %vm37, %v169, %v167
  %v173 = vrot.slane %v138, 1
  %v174 = vrot.slane %v140, 1
  %v175 = vrot.slane %v142, 1
  %v176 = vsel %vm44, %v174, %v175
  %v177 = vsel %vm44, %v173, %v174
  %v178 = vsel %vm44, %v175, %v173
  %v179 = vmul.f32 %v119, 0.41421357
  %v180 = vmul.f32 %v120, 0.41421357
  %v181 = vmul.f32 %v121, 0.41421357
  %vm182 = vcmp.le.f32.partialorder %v122, %v179
  %vm183 = vcmp.le.f32.partialorder %v123, %v180
  %vm184 = vcmp.le.f32.partialorder %v124, %v181
  %v185 = vmul.f32 %v119, 2.4142137
  %v186 = vmul.f32 %v120, 2.4142137
  %v187 = vmul.f32 %v121, 2.4142137
  %vm188 = vcmp.gt.f32.partialorder %v122, %v185
  %vm189 = vcmp.gt.f32.partialorder %v123, %v186
  %vm190 = vcmp.gt.f32.partialorder %v124, %v187
  %v191 = vmul.f32 %v87, %v105
  %v192 = vmul.f32 %v88, %v106
  %v193 = vmul.f32 %v89, %v107
  %vm194 = vcmp.ge.f32.partialorder %v191, 0.0
  %vm195 = vcmp.ge.f32.partialorder %v192, 0.0
  %vm196 = vcmp.ge.f32.partialorder %v193, 0.0
  %v197 = vsel %vm194, %v165, %v177
  %v198 = vsel %vm195, %v164, %v176
  %v199 = vsel %vm196, %v166, %v178
  %v200 = vsel %vm188, %v153, %v197
  %v201 = vsel %vm189, %v152, %v198
  %v202 = vsel %vm190, %v154, %v199
  %v203 = vsel %vm182, %v132, %v200
  %v204 = vsel %vm183, %v134, %v201
  %v205 = vsel %vm184, %v136, %v202
  %v206 = vsel %vm194, %v172, %v160
  %v207 = vsel %vm195, %v171, %v159
  %v208 = vsel %vm196, %v170, %v158
  %v209 = vsel %vm188, %v148, %v206
  %v210 = vsel %vm189, %v147, %v207
  %v211 = vsel %vm190, %v146, %v208
  %v212 = vsel %vm182, %v138, %v209
  %v213 = vsel %vm183, %v140, %v210
  %v214 = vsel %vm184, %v142, %v211
  %vm215 = vcmp.ge.f32.partialorder %v128, %v203
  %vm216 = vcmp.ge.f32.partialorder %v129, %v204
  %vm217 = vcmp.ge.f32.partialorder %v130, %v205
  %vm218 = vcmp.ge.f32.partialorder %v128, %v212
  %vm219 = vcmp.ge.f32.partialorder %v129, %v213
  %vm220 = vcmp.ge.f32.partialorder %v130, %v214
  %vm221 = vmand %vm215, %vm218
  %vm222 = vmand %vm216, %vm219
  %vm223 = vmand %vm217, %vm220
  %v224 = vsel %vm221, %v128, 0.0
  %v225 = vsel %vm222, %v129, 0.0
  %v226 = vsel %vm223, %v130, 0.0
  %vm227 = vcmp.ge.f32.partialorder %v224, 12.75
  %vm228 = vcmp.ge.f32.partialorder %v225, 12.75
  %vm229 = vcmp.ge.f32.partialorder %v226, 12.75
  %v230 = vsel %vm227, 1, 0
  %v231 = vsel %vm228, 1, 0
  %v232 = vsel %vm229, 1, 0
  %v233 = vcvt.s32.f32 %v230
  %v234 = vcvt.s32.f32 %v231
  %v235 = vcvt.s32.f32 %v232
  %vm236 = vcmp.ge.f32.partialorder %v224, 216.75
  %vm237 = vcmp.ge.f32.partialorder %v225, 216.75
  %vm238 = vcmp.ge.f32.partialorder %v226, 216.75
  %v239 = vsel %vm236, 1, 0
  %v240 = vsel %vm237, 1, 0
  %v241 = vsel %vm238, 1, 0
  %v242 = vcvt.s32.f32 %v239
  %v243 = vcvt.s32.f32 %v240
  %v244 = vcvt.s32.f32 %v241
  %v245 = vadd.f32 %v242, %v243
  %v246 = vadd.f32 %v245, %v244
  %247 = vadd.xlane.f32.xlu0 %v246
  %v248 = vpop.xlane.xlu0 %247
  %v249 = vrot.slane %v248, 4
  %v250 = vadd.f32 %v248, %v249
  %v251 = vrot.slane %v250, 2
  %v252 = vadd.f32 %v250, %v251
  %v253 = vrot.slane %v252, 1
  %v254 = vadd.f32 %v252, %v253
  %s255 = vtos %v254
  // While loop
  $region6: #{canny_forward.1} parent=0 // loop_pre_header
    _
  $region7: #{canny_forward.1} parent=0 // loop_header
    %s257 = sphi 0, %s904
    %s258 = sphi 1, %s906
    %v259 = vphi %v242, %v890
    %v260 = vphi %v243, %v891
    %v261 = vphi %v244, %v892
    %s262 = sphi %s255, %s903
    %p263 = scmp.gt.s32.totalorder %s258, 0
    %p264 = scmp.lt.s32.totalorder %s257, 17
    %p265 = pnand %p263, %p264
    %p266 = pneg %p265
  $region8: #{canny_forward.1} parent=0 // loop_header_branch
    %268 = sbr.rel (%p265) target = $region12
  $region9: #{canny_forward.1} parent=0 // loop_body
    %269 = vrot.lane.b32.xlu0 %v259, 127
    %v270 = vpop.permute.xlu0 %269
    %271 = vrot.lane.b32.xlu0 %v260, 127
    %v272 = vpop.permute.xlu0 %271
    %273 = vrot.lane.b32.xlu0 %v261, 127
    %v274 = vpop.permute.xlu0 %273
    %275 = vrot.lane.b32.xlu0 %v259, 1
    %v276 = vpop.permute.xlu0 %275
    %277 = vrot.lane.b32.xlu0 %v260, 1
    %v278 = vpop.permute.xlu0 %277
    %279 = vrot.lane.b32.xlu0 %v261, 1
    %v280 = vpop.permute.xlu0 %279
    %v281 = vmax.f32 %v270, %v276
    %v282 = vmax.f32 %v272, %v278
    %v283 = vmax.f32 %v274, %v280
    %v284 = vmax.f32 %v259, %v281
    %v285 = vmax.f32 %v260, %v282
    %v286 = vmax.f32 %v261, %v283
    %v287 = vrot.slane %v284, 1
    %v288 = vrot.slane %v285, 1
    %v289 = vrot.slane %v286, 1
    %v290 = vsel %vm44, %v288, %v289
    %v291 = vsel %vm44, %v287, %v288
    %v292 = vsel %vm44, %v289, %v287
    %v293 = vrot.slane %v284, 7
    %v294 = vrot.slane %v285, 7
    %v295 = vrot.slane %v286, 7
    %v296 = vsel %vm37, %v294, %v295
    %v297 = vsel %vm37, %v293, %v294
    %v298 = vsel %vm37, %v295, %v293
    %v299 = vmax.f32 %v291, %v298
    %v300 = vmax.f32 %v290, %v297
    %v301 = vmax.f32 %v292, %v296
    %v302 = vmax.f32 %v284, %v299
    %v303 = vmax.f32 %v285, %v300
    %v304 = vmax.f32 %v286, %v301
    %v305 = vmul.f32 %v233, %v302
    %v306 = vmul.f32 %v234, %v303
    %v307 = vmul.f32 %v235, %v304
    %308 = vrot.lane.b32.xlu0 %v305, 127
    %v309 = vpop.permute.xlu0 %308
    %310 = vrot.lane.b32.xlu0 %v306, 127
    %v311 = vpop.permute.xlu0 %310
    %312 = vrot.lane.b32.xlu0 %v307, 127
    %v313 = vpop.permute.xlu0 %312
    %314 = vrot.lane.b32.xlu0 %v305, 1
    %v315 = vpop.permute.xlu0 %314
    %316 = vrot.lane.b32.xlu0 %v306, 1
    %v317 = vpop.permute.xlu0 %316
    %318 = vrot.lane.b32.xlu0 %v307, 1
    %v319 = vpop.permute.xlu0 %318
    %v320 = vmax.f32 %v309, %v315
    %v321 = vmax.f32 %v311, %v317
    %v322 = vmax.f32 %v313, %v319
    %v323 = vmax.f32 %v305, %v320
    %v324 = vmax.f32 %v306, %v321
    %v325 = vmax.f32 %v307, %v322
    %v326 = vrot.slane %v323, 1
    %v327 = vrot.slane %v324, 1
    %v328 = vrot.slane %v325, 1
    %v329 = vsel %vm44, %v327, %v328
    %v330 = vsel %vm44, %v326, %v327
    %v331 = vsel %vm44, %v328, %v326
    %v332 = vrot.slane %v323, 7
    %v333 = vrot.slane %v324, 7
    %v334 = vrot.slane %v325, 7
    %v335 = vsel %vm37, %v333, %v334
    %v336 = vsel %vm37, %v332, %v333
    %v337 = vsel %vm37, %v334, %v332
    %v338 = vmax.f32 %v330, %v337
    %v339 = vmax.f32 %v329, %v336
    %v340 = vmax.f32 %v331, %v335
    %v341 = vmax.f32 %v323, %v338
    %v342 = vmax.f32 %v324, %v339
    %v343 = vmax.f32 %v325, %v340
    %v344 = vmul.f32 %v233, %v341
    %v345 = vmul.f32 %v234, %v342
    %v346 = vmul.f32 %v235, %v343
    %347 = vrot.lane.b32.xlu0 %v344, 127
    %v348 = vpop.permute.xlu0 %347
    %349 = vrot.lane.b32.xlu0 %v345, 127
    %v350 = vpop.permute.xlu0 %349
    %351 = vrot.lane.b32.xlu0 %v346, 127
    %v352 = vpop.permute.xlu0 %351
    %353 = vrot.lane.b32.xlu0 %v344, 1
    %v354 = vpop.permute.xlu0 %353
    %355 = vrot.lane.b32.xlu0 %v345, 1
    %v356 = vpop.permute.xlu0 %355
    %357 = vrot.lane.b32.xlu0 %v346, 1
    %v358 = vpop.permute.xlu0 %357
    %v359 = vmax.f32 %v348, %v354
    %v360 = vmax.f32 %v350, %v356
    %v361 = vmax.f32 %v352, %v358
    %v362 = vmax.f32 %v344, %v359
    %v363 = vmax.f32 %v345, %v360
    %v364 = vmax.f32 %v346, %v361
    %v365 = vrot.slane %v362, 1
    %v366 = vrot.slane %v363, 1
    %v367 = vrot.slane %v364, 1
    %v368 = vsel %vm44, %v366, %v367
    %v369 = vsel %vm44, %v365, %v366
    %v370 = vsel %vm44, %v367, %v365
    %v371 = vrot.slane %v362, 7
    %v372 = vrot.slane %v363, 7
    %v373 = vrot.slane %v364, 7
    %v374 = vsel %vm37, %v372, %v373
    %v375 = vsel %vm37, %v371, %v372
    %v376 = vsel %vm37, %v373, %v371
    %v377 = vmax.f32 %v369, %v376
    %v378 = vmax.f32 %v368, %v375
    %v379 = vmax.f32 %v370, %v374
    %v380 = vmax.f32 %v362, %v377
    %v381 = vmax.f32 %v363, %v378
    %v382 = vmax.f32 %v364, %v379
    %v383 = vmul.f32 %v233, %v380
    %v384 = vmul.f32 %v234, %v381
    %v385 = vmul.f32 %v235, %v382
    %386 = vrot.lane.b32.xlu0 %v383, 127
    %v387 = vpop.permute.xlu0 %386
    %388 = vrot.lane.b32.xlu0 %v384, 127
    %v389 = vpop.permute.xlu0 %388
    %390 = vrot.lane.b32.xlu0 %v385, 127
    %v391 = vpop.permute.xlu0 %390
    %392 = vrot.lane.b32.xlu0 %v383, 1
    %v393 = vpop.permute.xlu0 %392
    %394 = vrot.lane.b32.xlu0 %v384, 1
    %v395 = vpop.permute.xlu0 %394
    %396 = vrot.lane.b32.xlu0 %v385, 1
    %v397 = vpop.permute.xlu0 %396
    %v398 = vmax.f32 %v387, %v393
    %v399 = vmax.f32 %v389, %v395
    %v400 = vmax.f32 %v391, %v397
    %v401 = vmax.f32 %v383, %v398
    %v402 = vmax.f32 %v384, %v399
    %v403 = vmax.f32 %v385, %v400
    %v404 = vrot.slane %v401, 1
    %v405 = vrot.slane %v402, 1
    %v406 = vrot.slane %v403, 1
    %v407 = vsel %vm44, %v405, %v406
    %v408 = vsel %vm44, %v404, %v405
    %v409 = vsel %vm44, %v406, %v404
    %v410 = vrot.slane %v401, 7
    %v411 = vrot.slane %v402, 7
    %v412 = vrot.slane %v403, 7
    %v413 = vsel %vm37, %v411, %v412
    %v414 = vsel %vm37, %v410, %v411
    %v415 = vsel %vm37, %v412, %v410
    %v416 = vmax.f32 %v408, %v415
    %v417 = vmax.f32 %v407, %v414
    %v418 = vmax.f32 %v409, %v413
    %v419 = vmax.f32 %v401, %v416
    %v420 = vmax.f32 %v402, %v417
    %v421 = vmax.f32 %v403, %v418
    %v422 = vmul.f32 %v233, %v419
    %v423 = vmul.f32 %v234, %v420
    %v424 = vmul.f32 %v235, %v421
    %425 = vrot.lane.b32.xlu0 %v422, 127
    %v426 = vpop.permute.xlu0 %425
    %427 = vrot.lane.b32.xlu0 %v423, 127
    %v428 = vpop.permute.xlu0 %427
    %429 = vrot.lane.b32.xlu0 %v424, 127
    %v430 = vpop.permute.xlu0 %429
    %431 = vrot.lane.b32.xlu0 %v422, 1
    %v432 = vpop.permute.xlu0 %431
    %433 = vrot.lane.b32.xlu0 %v423, 1
    %v434 = vpop.permute.xlu0 %433
    %435 = vrot.lane.b32.xlu0 %v424, 1
    %v436 = vpop.permute.xlu0 %435
    %v437 = vmax.f32 %v426, %v432
    %v438 = vmax.f32 %v428, %v434
    %v439 = vmax.f32 %v430, %v436
    %v440 = vmax.f32 %v422, %v437
    %v441 = vmax.f32 %v423, %v438
    %v442 = vmax.f32 %v424, %v439
    %v443 = vrot.slane %v440, 1
    %v444 = vrot.slane %v441, 1
    %v445 = vrot.slane %v442, 1
    %v446 = vsel %vm44, %v444, %v445
    %v447 = vsel %vm44, %v443, %v444
    %v448 = vsel %vm44, %v445, %v443
    %v449 = vrot.slane %v440, 7
    %v450 = vrot.slane %v441, 7
    %v451 = vrot.slane %v442, 7
    %v452 = vsel %vm37, %v450, %v451
    %v453 = vsel %vm37, %v449, %v450
    %v454 = vsel %vm37, %v451, %v449
    %v455 = vmax.f32 %v447, %v454
    %v456 = vmax.f32 %v446, %v453
    %v457 = vmax.f32 %v448, %v452
    %v458 = vmax.f32 %v440, %v455
    %v459 = vmax.f32 %v441, %v456
    %v460 = vmax.f32 %v442, %v457
    %v461 = vmul.f32 %v233, %v458
    %v462 = vmul.f32 %v234, %v459
    %v463 = vmul.f32 %v235, %v460
    %464 = vrot.lane.b32.xlu0 %v461, 127
    %v465 = vpop.permute.xlu0 %464
    %466 = vrot.lane.b32.xlu0 %v462, 127
    %v467 = vpop.permute.xlu0 %466
    %468 = vrot.lane.b32.xlu0 %v463, 127
    %v469 = vpop.permute.xlu0 %468
    %470 = vrot.lane.b32.xlu0 %v461, 1
    %v471 = vpop.permute.xlu0 %470
    %472 = vrot.lane.b32.xlu0 %v462, 1
    %v473 = vpop.permute.xlu0 %472
    %474 = vrot.lane.b32.xlu0 %v463, 1
    %v475 = vpop.permute.xlu0 %474
    %v476 = vmax.f32 %v465, %v471
    %v477 = vmax.f32 %v467, %v473
    %v478 = vmax.f32 %v469, %v475
    %v479 = vmax.f32 %v461, %v476
    %v480 = vmax.f32 %v462, %v477
    %v481 = vmax.f32 %v463, %v478
    %v482 = vrot.slane %v479, 1
    %v483 = vrot.slane %v480, 1
    %v484 = vrot.slane %v481, 1
    %v485 = vsel %vm44, %v483, %v484
    %v486 = vsel %vm44, %v482, %v483
    %v487 = vsel %vm44, %v484, %v482
    %v488 = vrot.slane %v479, 7
    %v489 = vrot.slane %v480, 7
    %v490 = vrot.slane %v481, 7
    %v491 = vsel %vm37, %v489, %v490
    %v492 = vsel %vm37, %v488, %v489
    %v493 = vsel %vm37, %v490, %v488
    %v494 = vmax.f32 %v486, %v493
    %v495 = vmax.f32 %v485, %v492
    %v496 = vmax.f32 %v487, %v491
    %v497 = vmax.f32 %v479, %v494
    %v498 = vmax.f32 %v480, %v495
    %v499 = vmax.f32 %v481, %v496
    %v500 = vmul.f32 %v233, %v497
    %v501 = vmul.f32 %v234, %v498
    %v502 = vmul.f32 %v235, %v499
    %503 = vrot.lane.b32.xlu0 %v500, 127
    %v504 = vpop.permute.xlu0 %503
    %505 = vrot.lane.b32.xlu0 %v501, 127
    %v506 = vpop.permute.xlu0 %505
    %507 = vrot.lane.b32.xlu0 %v502, 127
    %v508 = vpop.permute.xlu0 %507
    %509 = vrot.lane.b32.xlu0 %v500, 1
    %v510 = vpop.permute.xlu0 %509
    %511 = vrot.lane.b32.xlu0 %v501, 1
    %v512 = vpop.permute.xlu0 %511
    %513 = vrot.lane.b32.xlu0 %v502, 1
    %v514 = vpop.permute.xlu0 %513
    %v515 = vmax.f32 %v504, %v510
    %v516 = vmax.f32 %v506, %v512
    %v517 = vmax.f32 %v508, %v514
    %v518 = vmax.f32 %v500, %v515
    %v519 = vmax.f32 %v501, %v516
    %v520 = vmax.f32 %v502, %v517
    %v521 = vrot.slane %v518, 1
    %v522 = vrot.slane %v519, 1
    %v523 = vrot.slane %v520, 1
    %v524 = vsel %vm44, %v522, %v523
    %v525 = vsel %vm44, %v521, %v522
    %v526 = vsel %vm44, %v523, %v521
    %v527 = vrot.slane %v518, 7
    %v528 = vrot.slane %v519, 7
    %v529 = vrot.slane %v520, 7
    %v530 = vsel %vm37, %v528, %v529
    %v531 = vsel %vm37, %v527, %v528
    %v532 = vsel %vm37, %v529, %v527
    %v533 = vmax.f32 %v525, %v532
    %v534 = vmax.f32 %v524, %v531
    %v535 = vmax.f32 %v526, %v530
    %v536 = vmax.f32 %v518, %v533
    %v537 = vmax.f32 %v519, %v534
    %v538 = vmax.f32 %v520, %v535
    %v539 = vmul.f32 %v233, %v536
    %v540 = vmul.f32 %v234, %v537
    %v541 = vmul.f32 %v235, %v538
    %542 = vrot.lane.b32.xlu0 %v539, 127
    %v543 = vpop.permute.xlu0 %542
    %544 = vrot.lane.b32.xlu0 %v540, 127
    %v545 = vpop.permute.xlu0 %544
    %546 = vrot.lane.b32.xlu0 %v541, 127
    %v547 = vpop.permute.xlu0 %546
    %548 = vrot.lane.b32.xlu0 %v539, 1
    %v549 = vpop.permute.xlu0 %548
    %550 = vrot.lane.b32.xlu0 %v540, 1
    %v551 = vpop.permute.xlu0 %550
    %552 = vrot.lane.b32.xlu0 %v541, 1
    %v553 = vpop.permute.xlu0 %552
    %v554 = vmax.f32 %v543, %v549
    %v555 = vmax.f32 %v545, %v551
    %v556 = vmax.f32 %v547, %v553
    %v557 = vmax.f32 %v539, %v554
    %v558 = vmax.f32 %v540, %v555
    %v559 = vmax.f32 %v541, %v556
    %v560 = vrot.slane %v557, 1
    %v561 = vrot.slane %v558, 1
    %v562 = vrot.slane %v559, 1
    %v563 = vsel %vm44, %v561, %v562
    %v564 = vsel %vm44, %v560, %v561
    %v565 = vsel %vm44, %v562, %v560
    %v566 = vrot.slane %v557, 7
    %v567 = vrot.slane %v558, 7
    %v568 = vrot.slane %v559, 7
    %v569 = vsel %vm37, %v567, %v568
    %v570 = vsel %vm37, %v566, %v567
    %v571 = vsel %vm37, %v568, %v566
    %v572 = vmax.f32 %v564, %v571
    %v573 = vmax.f32 %v563, %v570
    %v574 = vmax.f32 %v565, %v569
    %v575 = vmax.f32 %v557, %v572
    %v576 = vmax.f32 %v558, %v573
    %v577 = vmax.f32 %v559, %v574
    %v578 = vmul.f32 %v233, %v575
    %v579 = vmul.f32 %v234, %v576
    %v580 = vmul.f32 %v235, %v577
    %581 = vrot.lane.b32.xlu0 %v578, 127
    %v582 = vpop.permute.xlu0 %581
    %583 = vrot.lane.b32.xlu0 %v579, 127
    %v584 = vpop.permute.xlu0 %583
    %585 = vrot.lane.b32.xlu0 %v580, 127
    %v586 = vpop.permute.xlu0 %585
    %587 = vrot.lane.b32.xlu0 %v578, 1
    %v588 = vpop.permute.xlu0 %587
    %589 = vrot.lane.b32.xlu0 %v579, 1
    %v590 = vpop.permute.xlu0 %589
    %591 = vrot.lane.b32.xlu0 %v580, 1
    %v592 = vpop.permute.xlu0 %591
    %v593 = vmax.f32 %v582, %v588
    %v594 = vmax.f32 %v584, %v590
    %v595 = vmax.f32 %v586, %v592
    %v596 = vmax.f32 %v578, %v593
    %v597 = vmax.f32 %v579, %v594
    %v598 = vmax.f32 %v580, %v595
    %v599 = vrot.slane %v596, 1
    %v600 = vrot.slane %v597, 1
    %v601 = vrot.slane %v598, 1
    %v602 = vsel %vm44, %v600, %v601
    %v603 = vsel %vm44, %v599, %v600
    %v604 = vsel %vm44, %v601, %v599
    %v605 = vrot.slane %v596, 7
    %v606 = vrot.slane %v597, 7
    %v607 = vrot.slane %v598, 7
    %v608 = vsel %vm37, %v606, %v607
    %v609 = vsel %vm37, %v605, %v606
    %v610 = vsel %vm37, %v607, %v605
    %v611 = vmax.f32 %v603, %v610
    %v612 = vmax.f32 %v602, %v609
    %v613 = vmax.f32 %v604, %v608
    %v614 = vmax.f32 %v596, %v611
    %v615 = vmax.f32 %v597, %v612
    %v616 = vmax.f32 %v598, %v613
    %v617 = vmul.f32 %v233, %v614
    %v618 = vmul.f32 %v234, %v615
    %v619 = vmul.f32 %v235, %v616
    %620 = vrot.lane.b32.xlu0 %v617, 127
    %v621 = vpop.permute.xlu0 %620
    %622 = vrot.lane.b32.xlu0 %v618, 127
    %v623 = vpop.permute.xlu0 %622
    %624 = vrot.lane.b32.xlu0 %v619, 127
    %v625 = vpop.permute.xlu0 %624
    %626 = vrot.lane.b32.xlu0 %v617, 1
    %v627 = vpop.permute.xlu0 %626
    %628 = vrot.lane.b32.xlu0 %v618, 1
    %v629 = vpop.permute.xlu0 %628
    %630 = vrot.lane.b32.xlu0 %v619, 1
    %v631 = vpop.permute.xlu0 %630
    %v632 = vmax.f32 %v621, %v627
    %v633 = vmax.f32 %v623, %v629
    %v634 = vmax.f32 %v625, %v631
    %v635 = vmax.f32 %v617, %v632
    %v636 = vmax.f32 %v618, %v633
    %v637 = vmax.f32 %v619, %v634
    %v638 = vrot.slane %v635, 1
    %v639 = vrot.slane %v636, 1
    %v640 = vrot.slane %v637, 1
    %v641 = vsel %vm44, %v639, %v640
    %v642 = vsel %vm44, %v638, %v639
    %v643 = vsel %vm44, %v640, %v638
    %v644 = vrot.slane %v635, 7
    %v645 = vrot.slane %v636, 7
    %v646 = vrot.slane %v637, 7
    %v647 = vsel %vm37, %v645, %v646
    %v648 = vsel %vm37, %v644, %v645
    %v649 = vsel %vm37, %v646, %v644
    %v650 = vmax.f32 %v642, %v649
    %v651 = vmax.f32 %v641, %v648
    %v652 = vmax.f32 %v643, %v647
    %v653 = vmax.f32 %v635, %v650
    %v654 = vmax.f32 %v636, %v651
    %v655 = vmax.f32 %v637, %v652
    %v656 = vmul.f32 %v233, %v653
    %v657 = vmul.f32 %v234, %v654
    %v658 = vmul.f32 %v235, %v655
    %659 = vrot.lane.b32.xlu0 %v656, 127
    %v660 = vpop.permute.xlu0 %659
    %661 = vrot.lane.b32.xlu0 %v657, 127
    %v662 = vpop.permute.xlu0 %661
    %663 = vrot.lane.b32.xlu0 %v658, 127
    %v664 = vpop.permute.xlu0 %663
    %665 = vrot.lane.b32.xlu0 %v656, 1
    %v666 = vpop.permute.xlu0 %665
    %667 = vrot.lane.b32.xlu0 %v657, 1
    %v668 = vpop.permute.xlu0 %667
    %669 = vrot.lane.b32.xlu0 %v658, 1
    %v670 = vpop.permute.xlu0 %669
    %v671 = vmax.f32 %v660, %v666
    %v672 = vmax.f32 %v662, %v668
    %v673 = vmax.f32 %v664, %v670
    %v674 = vmax.f32 %v656, %v671
    %v675 = vmax.f32 %v657, %v672
    %v676 = vmax.f32 %v658, %v673
    %v677 = vrot.slane %v674, 1
    %v678 = vrot.slane %v675, 1
    %v679 = vrot.slane %v676, 1
    %v680 = vsel %vm44, %v678, %v679
    %v681 = vsel %vm44, %v677, %v678
    %v682 = vsel %vm44, %v679, %v677
    %v683 = vrot.slane %v674, 7
    %v684 = vrot.slane %v675, 7
    %v685 = vrot.slane %v676, 7
    %v686 = vsel %vm37, %v684, %v685
    %v687 = vsel %vm37, %v683, %v684
    %v688 = vsel %vm37, %v685, %v683
    %v689 = vmax.f32 %v681, %v688
    %v690 = vmax.f32 %v680, %v687
    %v691 = vmax.f32 %v682, %v686
    %v692 = vmax.f32 %v674, %v689
    %v693 = vmax.f32 %v675, %v690
    %v694 = vmax.f32 %v676, %v691
    %v695 = vmul.f32 %v233, %v692
    %v696 = vmul.f32 %v234, %v693
    %v697 = vmul.f32 %v235, %v694
    %698 = vrot.lane.b32.xlu0 %v695, 127
    %v699 = vpop.permute.xlu0 %698
    %700 = vrot.lane.b32.xlu0 %v696, 127
    %v701 = vpop.permute.xlu0 %700
    %702 = vrot.lane.b32.xlu0 %v697, 127
    %v703 = vpop.permute.xlu0 %702
    %704 = vrot.lane.b32.xlu0 %v695, 1
    %v705 = vpop.permute.xlu0 %704
    %706 = vrot.lane.b32.xlu0 %v696, 1
    %v707 = vpop.permute.xlu0 %706
    %708 = vrot.lane.b32.xlu0 %v697, 1
    %v709 = vpop.permute.xlu0 %708
    %v710 = vmax.f32 %v699, %v705
    %v711 = vmax.f32 %v701, %v707
    %v712 = vmax.f32 %v703, %v709
    %v713 = vmax.f32 %v695, %v710
    %v714 = vmax.f32 %v696, %v711
    %v715 = vmax.f32 %v697, %v712
    %v716 = vrot.slane %v713, 1
    %v717 = vrot.slane %v714, 1
    %v718 = vrot.slane %v715, 1
    %v719 = vsel %vm44, %v717, %v718
    %v720 = vsel %vm44, %v716, %v717
    %v721 = vsel %vm44, %v718, %v716
    %v722 = vrot.slane %v713, 7
    %v723 = vrot.slane %v714, 7
    %v724 = vrot.slane %v715, 7
    %v725 = vsel %vm37, %v723, %v724
    %v726 = vsel %vm37, %v722, %v723
    %v727 = vsel %vm37, %v724, %v722
    %v728 = vmax.f32 %v720, %v727
    %v729 = vmax.f32 %v719, %v726
    %v730 = vmax.f32 %v721, %v725
    %v731 = vmax.f32 %v713, %v728
    %v732 = vmax.f32 %v714, %v729
    %v733 = vmax.f32 %v715, %v730
    %v734 = vmul.f32 %v233, %v731
    %v735 = vmul.f32 %v234, %v732
    %v736 = vmul.f32 %v235, %v733
    %737 = vrot.lane.b32.xlu0 %v734, 127
    %v738 = vpop.permute.xlu0 %737
    %739 = vrot.lane.b32.xlu0 %v735, 127
    %v740 = vpop.permute.xlu0 %739
    %741 = vrot.lane.b32.xlu0 %v736, 127
    %v742 = vpop.permute.xlu0 %741
    %743 = vrot.lane.b32.xlu0 %v734, 1
    %v744 = vpop.permute.xlu0 %743
    %745 = vrot.lane.b32.xlu0 %v735, 1
    %v746 = vpop.permute.xlu0 %745
    %747 = vrot.lane.b32.xlu0 %v736, 1
    %v748 = vpop.permute.xlu0 %747
    %v749 = vmax.f32 %v738, %v744
    %v750 = vmax.f32 %v740, %v746
    %v751 = vmax.f32 %v742, %v748
    %v752 = vmax.f32 %v734, %v749
    %v753 = vmax.f32 %v735, %v750
    %v754 = vmax.f32 %v736, %v751
    %v755 = vrot.slane %v752, 1
    %v756 = vrot.slane %v753, 1
    %v757 = vrot.slane %v754, 1
    %v758 = vsel %vm44, %v756, %v757
    %v759 = vsel %vm44, %v755, %v756
    %v760 = vsel %vm44, %v757, %v755
    %v761 = vrot.slane %v752, 7
    %v762 = vrot.slane %v753, 7
    %v763 = vrot.slane %v754, 7
    %v764 = vsel %vm37, %v762, %v763
    %v765 = vsel %vm37, %v761, %v762
    %v766 = vsel %vm37, %v763, %v761
    %v767 = vmax.f32 %v759, %v766
    %v768 = vmax.f32 %v758, %v765
    %v769 = vmax.f32 %v760, %v764
    %v770 = vmax.f32 %v752, %v767
    %v771 = vmax.f32 %v753, %v768
    %v772 = vmax.f32 %v754, %v769
    %v773 = vmul.f32 %v233, %v770
    %v774 = vmul.f32 %v234, %v771
    %v775 = vmul.f32 %v235, %v772
    %776 = vrot.lane.b32.xlu0 %v773, 127
    %v777 = vpop.permute.xlu0 %776
    %778 = vrot.lane.b32.xlu0 %v774, 127
    %v779 = vpop.permute.xlu0 %778
    %780 = vrot.lane.b32.xlu0 %v775, 127
    %v781 = vpop.permute.xlu0 %780
    %782 = vrot.lane.b32.xlu0 %v773, 1
    %v783 = vpop.permute.xlu0 %782
    %784 = vrot.lane.b32.xlu0 %v774, 1
    %v785 = vpop.permute.xlu0 %784
    %786 = vrot.lane.b32.xlu0 %v775, 1
    %v787 = vpop.permute.xlu0 %786
    %v788 = vmax.f32 %v777, %v783
    %v789 = vmax.f32 %v779, %v785
    %v790 = vmax.f32 %v781, %v787
    %v791 = vmax.f32 %v773, %v788
    %v792 = vmax.f32 %v774, %v789
    %v793 = vmax.f32 %v775, %v790
    %v794 = vrot.slane %v791, 1
    %v795 = vrot.slane %v792, 1
    %v796 = vrot.slane %v793, 1
    %v797 = vsel %vm44, %v795, %v796
    %v798 = vsel %vm44, %v794, %v795
    %v799 = vsel %vm44, %v796, %v794
    %v800 = vrot.slane %v791, 7
    %v801 = vrot.slane %v792, 7
    %v802 = vrot.slane %v793, 7
    %v803 = vsel %vm37, %v801, %v802
    %v804 = vsel %vm37, %v800, %v801
    %v805 = vsel %vm37, %v802, %v800
    %v806 = vmax.f32 %v798, %v805
    %v807 = vmax.f32 %v797, %v804
    %v808 = vmax.f32 %v799, %v803
    %v809 = vmax.f32 %v791, %v806
    %v810 = vmax.f32 %v792, %v807
    %v811 = vmax.f32 %v793, %v808
    %v812 = vmul.f32 %v233, %v809
    %v813 = vmul.f32 %v234, %v810
    %v814 = vmul.f32 %v235, %v811
    %815 = vrot.lane.b32.xlu0 %v812, 127
    %v816 = vpop.permute.xlu0 %815
    %817 = vrot.lane.b32.xlu0 %v813, 127
    %v818 = vpop.permute.xlu0 %817
    %819 = vrot.lane.b32.xlu0 %v814, 127
    %v820 = vpop.permute.xlu0 %819
    %821 = vrot.lane.b32.xlu0 %v812, 1
    %v822 = vpop.permute.xlu0 %821
    %823 = vrot.lane.b32.xlu0 %v813, 1
    %v824 = vpop.permute.xlu0 %823
    %825 = vrot.lane.b32.xlu0 %v814, 1
    %v826 = vpop.permute.xlu0 %825
    %v827 = vmax.f32 %v816, %v822
    %v828 = vmax.f32 %v818, %v824
    %v829 = vmax.f32 %v820, %v826
    %v830 = vmax.f32 %v812, %v827
    %v831 = vmax.f32 %v813, %v828
    %v832 = vmax.f32 %v814, %v829
    %v833 = vrot.slane %v830, 1
    %v834 = vrot.slane %v831, 1
    %v835 = vrot.slane %v832, 1
    %v836 = vsel %vm44, %v834, %v835
    %v837 = vsel %vm44, %v833, %v834
    %v838 = vsel %vm44, %v835, %v833
    %v839 = vrot.slane %v830, 7
    %v840 = vrot.slane %v831, 7
    %v841 = vrot.slane %v832, 7
    %v842 = vsel %vm37, %v840, %v841
    %v843 = vsel %vm37, %v839, %v840
    %v844 = vsel %vm37, %v841, %v839
    %v845 = vmax.f32 %v837, %v844
    %v846 = vmax.f32 %v836, %v843
    %v847 = vmax.f32 %v838, %v842
    %v848 = vmax.f32 %v830, %v845
    %v849 = vmax.f32 %v831, %v846
    %v850 = vmax.f32 %v832, %v847
    %v851 = vmul.f32 %v233, %v848
    %v852 = vmul.f32 %v234, %v849
    %v853 = vmul.f32 %v235, %v850
    %854 = vrot.lane.b32.xlu0 %v851, 127
    %v855 = vpop.permute.xlu0 %854
    %856 = vrot.lane.b32.xlu0 %v852, 127
    %v857 = vpop.permute.xlu0 %856
    %858 = vrot.lane.b32.xlu0 %v853, 127
    %v859 = vpop.permute.xlu0 %858
    %860 = vrot.lane.b32.xlu0 %v851, 1
    %v861 = vpop.permute.xlu0 %860
    %862 = vrot.lane.b32.xlu0 %v852, 1
    %v863 = vpop.permute.xlu0 %862
    %864 = vrot.lane.b32.xlu0 %v853, 1
    %v865 = vpop.permute.xlu0 %864
    %v866 = vmax.f32 %v855, %v861
    %v867 = vmax.f32 %v857, %v863
    %v868 = vmax.f32 %v859, %v865
    %v869 = vmax.f32 %v851, %v866
    %v870 = vmax.f32 %v852, %v867
    %v871 = vmax.f32 %v853, %v868
    %v872 = vrot.slane %v869, 1
    %v873 = vrot.slane %v870, 1
    %v874 = vrot.slane %v871, 1
    %v875 = vsel %vm44, %v873, %v874
    %v876 = vsel %vm44, %v872, %v873
    %v877 = vsel %vm44, %v874, %v872
    %v878 = vrot.slane %v869, 7
    %v879 = vrot.slane %v870, 7
    %v880 = vrot.slane %v871, 7
    %v881 = vsel %vm37, %v879, %v880
    %v882 = vsel %vm37, %v878, %v879
    %v883 = vsel %vm37, %v880, %v878
    %v884 = vmax.f32 %v876, %v883
    %v885 = vmax.f32 %v875, %v882
    %v886 = vmax.f32 %v877, %v881
    %v887 = vmax.f32 %v869, %v884
    %v888 = vmax.f32 %v870, %v885
    %v889 = vmax.f32 %v871, %v886
    %v890 = vmul.f32 %v233, %v887
    %v891 = vmul.f32 %v234, %v888
    %v892 = vmul.f32 %v235, %v889
    %v893 = vadd.f32 %v890, %v891
    %v894 = vadd.f32 %v893, %v892
    %895 = vadd.xlane.f32.xlu0 %v894
    %v896 = vpop.xlane.xlu0 %895
    %v897 = vrot.slane %v896, 4
    %v898 = vadd.f32 %v896, %v897
    %v899 = vrot.slane %v898, 2
    %v900 = vadd.f32 %v898, %v899
    %v901 = vrot.slane %v900, 1
    %v902 = vadd.f32 %v900, %v901
    %s903 = vtos %v902
    %s904 = sadd.s32 %s257, 1
    %p905 = scmp.ne.f32.partialorder %s903, %s262
    %s906 = scalar_select %p905, 1, 0
  $region10: #{canny_forward.1} parent=0 // loop_footer
    _
  $region11: #{canny_forward.1} parent=0 // loop_footer_branch
    %256 = sbr.rel target = $region7
  $region12: #{canny_forward.1} parent=0 // loop_exit
    _
  %907 = vrot.lane.b32.xlu0 %v259, 127
  %v908 = vpop.permute.xlu0 %907
  %909 = vrot.lane.b32.xlu0 %v260, 127
  %v910 = vpop.permute.xlu0 %909
  %911 = vrot.lane.b32.xlu0 %v261, 127
  %v912 = vpop.permute.xlu0 %911
  %913 = vrot.lane.b32.xlu0 %v259, 1
  %v914 = vpop.permute.xlu0 %913
  %915 = vrot.lane.b32.xlu0 %v260, 1
  %v916 = vpop.permute.xlu0 %915
  %917 = vrot.lane.b32.xlu0 %v261, 1
  %v918 = vpop.permute.xlu0 %917
  %v919 = vmax.f32 %v908, %v914
  %v920 = vmax.f32 %v910, %v916
  %v921 = vmax.f32 %v912, %v918
  %v922 = vmax.f32 %v259, %v919
  %v923 = vmax.f32 %v260, %v920
  %v924 = vmax.f32 %v261, %v921
  %v925 = vrot.slane %v922, 1
  %v926 = vrot.slane %v923, 1
  %v927 = vrot.slane %v924, 1
  %v928 = vsel %vm44, %v926, %v927
  %v929 = vsel %vm44, %v925, %v926
  %v930 = vsel %vm44, %v927, %v925
  %v931 = vrot.slane %v922, 7
  %v932 = vrot.slane %v923, 7
  %v933 = vrot.slane %v924, 7
  %v934 = vsel %vm37, %v932, %v933
  %v935 = vsel %vm37, %v931, %v932
  %v936 = vsel %vm37, %v933, %v931
  %v937 = vmax.f32 %v929, %v936
  %v938 = vmax.f32 %v928, %v935
  %v939 = vmax.f32 %v930, %v934
  %v940 = vmax.f32 %v922, %v937
  %v941 = vmax.f32 %v923, %v938
  %v942 = vmax.f32 %v924, %v939
  %v943 = vsel %vm116, %v940, 1.0
  %v944 = vsel %vm117, %v941, 1.0
  %v945 = vsel %vm118, %v942, 1.0
  %946 = vrot.lane.b32.xlu0 %v943, 127
  %v947 = vpop.permute.xlu0 %946
  %948 = vrot.lane.b32.xlu0 %v944, 127
  %v949 = vpop.permute.xlu0 %948
  %950 = vrot.lane.b32.xlu0 %v945, 127
  %v951 = vpop.permute.xlu0 %950
  %952 = vrot.lane.b32.xlu0 %v943, 1
  %v953 = vpop.permute.xlu0 %952
  %954 = vrot.lane.b32.xlu0 %v944, 1
  %v955 = vpop.permute.xlu0 %954
  %956 = vrot.lane.b32.xlu0 %v945, 1
  %v957 = vpop.permute.xlu0 %956
  %v958 = vmin.f32 %v947, %v953
  %v959 = vmin.f32 %v949, %v955
  %v960 = vmin.f32 %v951, %v957
  %v961 = vmin.f32 %v943, %v958
  %v962 = vmin.f32 %v944, %v959
  %v963 = vmin.f32 %v945, %v960
  %v964 = vrot.slane %v961, 1
  %v965 = vrot.slane %v962, 1
  %v966 = vrot.slane %v963, 1
  %v967 = vsel %vm44, %v965, %v966
  %v968 = vsel %vm44, %v964, %v965
  %v969 = vsel %vm44, %v966, %v964
  %v970 = vrot.slane %v961, 7
  %v971 = vrot.slane %v962, 7
  %v972 = vrot.slane %v963, 7
  %v973 = vsel %vm37, %v971, %v972
  %v974 = vsel %vm37, %v970, %v971
  %v975 = vsel %vm37, %v972, %v970
  %v976 = vmin.f32 %v968, %v975
  %v977 = vmin.f32 %v967, %v974
  %v978 = vmin.f32 %v969, %v973
  %v979 = vmin.f32 %v961, %v976
  %v980 = vmin.f32 %v962, %v977
  %v981 = vmin.f32 %v963, %v978
  %vm982 = vcmp.gt.f32.partialorder %v979, 0.5
  %vm983 = vcmp.gt.f32.partialorder %v980, 0.5
  %vm984 = vcmp.gt.f32.partialorder %v981, 0.5
  %vm985 = vmand %vm982, %vm116
  %vm986 = vmand %vm983, %vm117
  %vm987 = vmand %vm984, %vm118
  %v988 = vmul.u32 %v36, 16
  %v989 = vmul.u32 %v108, 16
  %v990 = vmul.u32 %v109, 16
  %v991 = vadd.s32 %v988, %v111
  %v992 = vadd.s32 %v989, %v111
  %v993 = vadd.s32 %v990, %v111
  %v994 = vadd.s32 %v991, 1
  %v995 = vadd.s32 %v992, 1
  %v996 = vadd.s32 %v993, 1
  %v997 = vsel %vm985, 0, 1073741824
  %v998 = vsel %vm986, 0, 1073741824
  %v999 = vsel %vm987, 0, 1073741824
  %v1000 = vsel %vm985, %v994, 1073741824
  %v1001 = vsel %vm986, %v995, 1073741824
  %v1002 = vsel %vm987, %v996, 1073741824
  // While loop
  $region13: #{canny_forward.1} parent=0 // loop_pre_header
    _
  $region14: #{canny_forward.1} parent=0 // loop_header
    %s1004 = sphi 0, %s1906
    %s1005 = sphi 1, %s1905
    %v1006 = vphi %v1000, %v1874
    %v1007 = vphi %v1001, %v1876
    %v1008 = vphi %v1002, %v1878
    %p1009 = scmp.gt.s32.totalorder %s1005, 0
    %p1010 = scmp.lt.s32.totalorder %s1004, 17
    %p1011 = pnand %p1009, %p1010
    %p1012 = pneg %p1011
  $region15: #{canny_forward.1} parent=0 // loop_header_branch
    %1014 = sbr.rel (%p1011) target = $region19
  $region16: #{canny_forward.1} parent=0 // loop_body
    %1015 = vrot.lane.b32.xlu0 %v1006, 127
    %v1016 = vpop.permute.xlu0 %1015
    %1017 = vrot.lane.b32.xlu0 %v1007, 127
    %v1018 = vpop.permute.xlu0 %1017
    %1019 = vrot.lane.b32.xlu0 %v1008, 127
    %v1020 = vpop.permute.xlu0 %1019
    %1021 = vrot.lane.b32.xlu0 %v1006, 1
    %v1022 = vpop.permute.xlu0 %1021
    %1023 = vrot.lane.b32.xlu0 %v1007, 1
    %v1024 = vpop.permute.xlu0 %1023
    %1025 = vrot.lane.b32.xlu0 %v1008, 1
    %v1026 = vpop.permute.xlu0 %1025
    %vm1027 = vcmp.lt.s32.totalorder %v1016, %v1022
    %v1028 = vsel %vm1027, %v1016, %v1022
    %vm1029 = vcmp.lt.s32.totalorder %v1018, %v1024
    %v1030 = vsel %vm1029, %v1018, %v1024
    %vm1031 = vcmp.lt.s32.totalorder %v1020, %v1026
    %v1032 = vsel %vm1031, %v1020, %v1026
    %vm1033 = vcmp.lt.s32.totalorder %v1006, %v1028
    %v1034 = vsel %vm1033, %v1006, %v1028
    %vm1035 = vcmp.lt.s32.totalorder %v1007, %v1030
    %v1036 = vsel %vm1035, %v1007, %v1030
    %vm1037 = vcmp.lt.s32.totalorder %v1008, %v1032
    %v1038 = vsel %vm1037, %v1008, %v1032
    %v1039 = vrot.slane %v1034, 1
    %v1040 = vrot.slane %v1036, 1
    %v1041 = vrot.slane %v1038, 1
    %v1042 = vsel %vm44, %v1040, %v1041
    %v1043 = vsel %vm44, %v1039, %v1040
    %v1044 = vsel %vm44, %v1041, %v1039
    %v1045 = vrot.slane %v1034, 7
    %v1046 = vrot.slane %v1036, 7
    %v1047 = vrot.slane %v1038, 7
    %v1048 = vsel %vm37, %v1046, %v1047
    %v1049 = vsel %vm37, %v1045, %v1046
    %v1050 = vsel %vm37, %v1047, %v1045
    %vm1051 = vcmp.lt.s32.totalorder %v1043, %v1050
    %v1052 = vsel %vm1051, %v1043, %v1050
    %vm1053 = vcmp.lt.s32.totalorder %v1042, %v1049
    %v1054 = vsel %vm1053, %v1042, %v1049
    %vm1055 = vcmp.lt.s32.totalorder %v1044, %v1048
    %v1056 = vsel %vm1055, %v1044, %v1048
    %vm1057 = vcmp.lt.s32.totalorder %v1034, %v1052
    %v1058 = vsel %vm1057, %v1034, %v1052
    %vm1059 = vcmp.lt.s32.totalorder %v1036, %v1054
    %v1060 = vsel %vm1059, %v1036, %v1054
    %vm1061 = vcmp.lt.s32.totalorder %v1038, %v1056
    %v1062 = vsel %vm1061, %v1038, %v1056
    %vm1063 = vcmp.gt.s32.totalorder %v1058, %v997
    %v1064 = vsel %vm1063, %v1058, %v997
    %vm1065 = vcmp.gt.s32.totalorder %v1060, %v998
    %v1066 = vsel %vm1065, %v1060, %v998
    %vm1067 = vcmp.gt.s32.totalorder %v1062, %v999
    %v1068 = vsel %vm1067, %v1062, %v999
    %1069 = vrot.lane.b32.xlu0 %v1064, 127
    %v1070 = vpop.permute.xlu0 %1069
    %1071 = vrot.lane.b32.xlu0 %v1066, 127
    %v1072 = vpop.permute.xlu0 %1071
    %1073 = vrot.lane.b32.xlu0 %v1068, 127
    %v1074 = vpop.permute.xlu0 %1073
    %1075 = vrot.lane.b32.xlu0 %v1064, 1
    %v1076 = vpop.permute.xlu0 %1075
    %1077 = vrot.lane.b32.xlu0 %v1066, 1
    %v1078 = vpop.permute.xlu0 %1077
    %1079 = vrot.lane.b32.xlu0 %v1068, 1
    %v1080 = vpop.permute.xlu0 %1079
    %vm1081 = vcmp.lt.s32.totalorder %v1070, %v1076
    %v1082 = vsel %vm1081, %v1070, %v1076
    %vm1083 = vcmp.lt.s32.totalorder %v1072, %v1078
    %v1084 = vsel %vm1083, %v1072, %v1078
    %vm1085 = vcmp.lt.s32.totalorder %v1074, %v1080
    %v1086 = vsel %vm1085, %v1074, %v1080
    %vm1087 = vcmp.lt.s32.totalorder %v1064, %v1082
    %v1088 = vsel %vm1087, %v1064, %v1082
    %vm1089 = vcmp.lt.s32.totalorder %v1066, %v1084
    %v1090 = vsel %vm1089, %v1066, %v1084
    %vm1091 = vcmp.lt.s32.totalorder %v1068, %v1086
    %v1092 = vsel %vm1091, %v1068, %v1086
    %v1093 = vrot.slane %v1088, 1
    %v1094 = vrot.slane %v1090, 1
    %v1095 = vrot.slane %v1092, 1
    %v1096 = vsel %vm44, %v1094, %v1095
    %v1097 = vsel %vm44, %v1093, %v1094
    %v1098 = vsel %vm44, %v1095, %v1093
    %v1099 = vrot.slane %v1088, 7
    %v1100 = vrot.slane %v1090, 7
    %v1101 = vrot.slane %v1092, 7
    %v1102 = vsel %vm37, %v1100, %v1101
    %v1103 = vsel %vm37, %v1099, %v1100
    %v1104 = vsel %vm37, %v1101, %v1099
    %vm1105 = vcmp.lt.s32.totalorder %v1097, %v1104
    %v1106 = vsel %vm1105, %v1097, %v1104
    %vm1107 = vcmp.lt.s32.totalorder %v1096, %v1103
    %v1108 = vsel %vm1107, %v1096, %v1103
    %vm1109 = vcmp.lt.s32.totalorder %v1098, %v1102
    %v1110 = vsel %vm1109, %v1098, %v1102
    %vm1111 = vcmp.lt.s32.totalorder %v1088, %v1106
    %v1112 = vsel %vm1111, %v1088, %v1106
    %vm1113 = vcmp.lt.s32.totalorder %v1090, %v1108
    %v1114 = vsel %vm1113, %v1090, %v1108
    %vm1115 = vcmp.lt.s32.totalorder %v1092, %v1110
    %v1116 = vsel %vm1115, %v1092, %v1110
    %vm1117 = vcmp.gt.s32.totalorder %v1112, %v997
    %v1118 = vsel %vm1117, %v1112, %v997
    %vm1119 = vcmp.gt.s32.totalorder %v1114, %v998
    %v1120 = vsel %vm1119, %v1114, %v998
    %vm1121 = vcmp.gt.s32.totalorder %v1116, %v999
    %v1122 = vsel %vm1121, %v1116, %v999
    %1123 = vrot.lane.b32.xlu0 %v1118, 127
    %v1124 = vpop.permute.xlu0 %1123
    %1125 = vrot.lane.b32.xlu0 %v1120, 127
    %v1126 = vpop.permute.xlu0 %1125
    %1127 = vrot.lane.b32.xlu0 %v1122, 127
    %v1128 = vpop.permute.xlu0 %1127
    %1129 = vrot.lane.b32.xlu0 %v1118, 1
    %v1130 = vpop.permute.xlu0 %1129
    %1131 = vrot.lane.b32.xlu0 %v1120, 1
    %v1132 = vpop.permute.xlu0 %1131
    %1133 = vrot.lane.b32.xlu0 %v1122, 1
    %v1134 = vpop.permute.xlu0 %1133
    %vm1135 = vcmp.lt.s32.totalorder %v1124, %v1130
    %v1136 = vsel %vm1135, %v1124, %v1130
    %vm1137 = vcmp.lt.s32.totalorder %v1126, %v1132
    %v1138 = vsel %vm1137, %v1126, %v1132
    %vm1139 = vcmp.lt.s32.totalorder %v1128, %v1134
    %v1140 = vsel %vm1139, %v1128, %v1134
    %vm1141 = vcmp.lt.s32.totalorder %v1118, %v1136
    %v1142 = vsel %vm1141, %v1118, %v1136
    %vm1143 = vcmp.lt.s32.totalorder %v1120, %v1138
    %v1144 = vsel %vm1143, %v1120, %v1138
    %vm1145 = vcmp.lt.s32.totalorder %v1122, %v1140
    %v1146 = vsel %vm1145, %v1122, %v1140
    %v1147 = vrot.slane %v1142, 1
    %v1148 = vrot.slane %v1144, 1
    %v1149 = vrot.slane %v1146, 1
    %v1150 = vsel %vm44, %v1148, %v1149
    %v1151 = vsel %vm44, %v1147, %v1148
    %v1152 = vsel %vm44, %v1149, %v1147
    %v1153 = vrot.slane %v1142, 7
    %v1154 = vrot.slane %v1144, 7
    %v1155 = vrot.slane %v1146, 7
    %v1156 = vsel %vm37, %v1154, %v1155
    %v1157 = vsel %vm37, %v1153, %v1154
    %v1158 = vsel %vm37, %v1155, %v1153
    %vm1159 = vcmp.lt.s32.totalorder %v1151, %v1158
    %v1160 = vsel %vm1159, %v1151, %v1158
    %vm1161 = vcmp.lt.s32.totalorder %v1150, %v1157
    %v1162 = vsel %vm1161, %v1150, %v1157
    %vm1163 = vcmp.lt.s32.totalorder %v1152, %v1156
    %v1164 = vsel %vm1163, %v1152, %v1156
    %vm1165 = vcmp.lt.s32.totalorder %v1142, %v1160
    %v1166 = vsel %vm1165, %v1142, %v1160
    %vm1167 = vcmp.lt.s32.totalorder %v1144, %v1162
    %v1168 = vsel %vm1167, %v1144, %v1162
    %vm1169 = vcmp.lt.s32.totalorder %v1146, %v1164
    %v1170 = vsel %vm1169, %v1146, %v1164
    %vm1171 = vcmp.gt.s32.totalorder %v1166, %v997
    %v1172 = vsel %vm1171, %v1166, %v997
    %vm1173 = vcmp.gt.s32.totalorder %v1168, %v998
    %v1174 = vsel %vm1173, %v1168, %v998
    %vm1175 = vcmp.gt.s32.totalorder %v1170, %v999
    %v1176 = vsel %vm1175, %v1170, %v999
    %1177 = vrot.lane.b32.xlu0 %v1172, 127
    %v1178 = vpop.permute.xlu0 %1177
    %1179 = vrot.lane.b32.xlu0 %v1174, 127
    %v1180 = vpop.permute.xlu0 %1179
    %1181 = vrot.lane.b32.xlu0 %v1176, 127
    %v1182 = vpop.permute.xlu0 %1181
    %1183 = vrot.lane.b32.xlu0 %v1172, 1
    %v1184 = vpop.permute.xlu0 %1183
    %1185 = vrot.lane.b32.xlu0 %v1174, 1
    %v1186 = vpop.permute.xlu0 %1185
    %1187 = vrot.lane.b32.xlu0 %v1176, 1
    %v1188 = vpop.permute.xlu0 %1187
    %vm1189 = vcmp.lt.s32.totalorder %v1178, %v1184
    %v1190 = vsel %vm1189, %v1178, %v1184
    %vm1191 = vcmp.lt.s32.totalorder %v1180, %v1186
    %v1192 = vsel %vm1191, %v1180, %v1186
    %vm1193 = vcmp.lt.s32.totalorder %v1182, %v1188
    %v1194 = vsel %vm1193, %v1182, %v1188
    %vm1195 = vcmp.lt.s32.totalorder %v1172, %v1190
    %v1196 = vsel %vm1195, %v1172, %v1190
    %vm1197 = vcmp.lt.s32.totalorder %v1174, %v1192
    %v1198 = vsel %vm1197, %v1174, %v1192
    %vm1199 = vcmp.lt.s32.totalorder %v1176, %v1194
    %v1200 = vsel %vm1199, %v1176, %v1194
    %v1201 = vrot.slane %v1196, 1
    %v1202 = vrot.slane %v1198, 1
    %v1203 = vrot.slane %v1200, 1
    %v1204 = vsel %vm44, %v1202, %v1203
    %v1205 = vsel %vm44, %v1201, %v1202
    %v1206 = vsel %vm44, %v1203, %v1201
    %v1207 = vrot.slane %v1196, 7
    %v1208 = vrot.slane %v1198, 7
    %v1209 = vrot.slane %v1200, 7
    %v1210 = vsel %vm37, %v1208, %v1209
    %v1211 = vsel %vm37, %v1207, %v1208
    %v1212 = vsel %vm37, %v1209, %v1207
    %vm1213 = vcmp.lt.s32.totalorder %v1205, %v1212
    %v1214 = vsel %vm1213, %v1205, %v1212
    %vm1215 = vcmp.lt.s32.totalorder %v1204, %v1211
    %v1216 = vsel %vm1215, %v1204, %v1211
    %vm1217 = vcmp.lt.s32.totalorder %v1206, %v1210
    %v1218 = vsel %vm1217, %v1206, %v1210
    %vm1219 = vcmp.lt.s32.totalorder %v1196, %v1214
    %v1220 = vsel %vm1219, %v1196, %v1214
    %vm1221 = vcmp.lt.s32.totalorder %v1198, %v1216
    %v1222 = vsel %vm1221, %v1198, %v1216
    %vm1223 = vcmp.lt.s32.totalorder %v1200, %v1218
    %v1224 = vsel %vm1223, %v1200, %v1218
    %vm1225 = vcmp.gt.s32.totalorder %v1220, %v997
    %v1226 = vsel %vm1225, %v1220, %v997
    %vm1227 = vcmp.gt.s32.totalorder %v1222, %v998
    %v1228 = vsel %vm1227, %v1222, %v998
    %vm1229 = vcmp.gt.s32.totalorder %v1224, %v999
    %v1230 = vsel %vm1229, %v1224, %v999
    %1231 = vrot.lane.b32.xlu0 %v1226, 127
    %v1232 = vpop.permute.xlu0 %1231
    %1233 = vrot.lane.b32.xlu0 %v1228, 127
    %v1234 = vpop.permute.xlu0 %1233
    %1235 = vrot.lane.b32.xlu0 %v1230, 127
    %v1236 = vpop.permute.xlu0 %1235
    %1237 = vrot.lane.b32.xlu0 %v1226, 1
    %v1238 = vpop.permute.xlu0 %1237
    %1239 = vrot.lane.b32.xlu0 %v1228, 1
    %v1240 = vpop.permute.xlu0 %1239
    %1241 = vrot.lane.b32.xlu0 %v1230, 1
    %v1242 = vpop.permute.xlu0 %1241
    %vm1243 = vcmp.lt.s32.totalorder %v1232, %v1238
    %v1244 = vsel %vm1243, %v1232, %v1238
    %vm1245 = vcmp.lt.s32.totalorder %v1234, %v1240
    %v1246 = vsel %vm1245, %v1234, %v1240
    %vm1247 = vcmp.lt.s32.totalorder %v1236, %v1242
    %v1248 = vsel %vm1247, %v1236, %v1242
    %vm1249 = vcmp.lt.s32.totalorder %v1226, %v1244
    %v1250 = vsel %vm1249, %v1226, %v1244
    %vm1251 = vcmp.lt.s32.totalorder %v1228, %v1246
    %v1252 = vsel %vm1251, %v1228, %v1246
    %vm1253 = vcmp.lt.s32.totalorder %v1230, %v1248
    %v1254 = vsel %vm1253, %v1230, %v1248
    %v1255 = vrot.slane %v1250, 1
    %v1256 = vrot.slane %v1252, 1
    %v1257 = vrot.slane %v1254, 1
    %v1258 = vsel %vm44, %v1256, %v1257
    %v1259 = vsel %vm44, %v1255, %v1256
    %v1260 = vsel %vm44, %v1257, %v1255
    %v1261 = vrot.slane %v1250, 7
    %v1262 = vrot.slane %v1252, 7
    %v1263 = vrot.slane %v1254, 7
    %v1264 = vsel %vm37, %v1262, %v1263
    %v1265 = vsel %vm37, %v1261, %v1262
    %v1266 = vsel %vm37, %v1263, %v1261
    %vm1267 = vcmp.lt.s32.totalorder %v1259, %v1266
    %v1268 = vsel %vm1267, %v1259, %v1266
    %vm1269 = vcmp.lt.s32.totalorder %v1258, %v1265
    %v1270 = vsel %vm1269, %v1258, %v1265
    %vm1271 = vcmp.lt.s32.totalorder %v1260, %v1264
    %v1272 = vsel %vm1271, %v1260, %v1264
    %vm1273 = vcmp.lt.s32.totalorder %v1250, %v1268
    %v1274 = vsel %vm1273, %v1250, %v1268
    %vm1275 = vcmp.lt.s32.totalorder %v1252, %v1270
    %v1276 = vsel %vm1275, %v1252, %v1270
    %vm1277 = vcmp.lt.s32.totalorder %v1254, %v1272
    %v1278 = vsel %vm1277, %v1254, %v1272
    %vm1279 = vcmp.gt.s32.totalorder %v1274, %v997
    %v1280 = vsel %vm1279, %v1274, %v997
    %vm1281 = vcmp.gt.s32.totalorder %v1276, %v998
    %v1282 = vsel %vm1281, %v1276, %v998
    %vm1283 = vcmp.gt.s32.totalorder %v1278, %v999
    %v1284 = vsel %vm1283, %v1278, %v999
    %1285 = vrot.lane.b32.xlu0 %v1280, 127
    %v1286 = vpop.permute.xlu0 %1285
    %1287 = vrot.lane.b32.xlu0 %v1282, 127
    %v1288 = vpop.permute.xlu0 %1287
    %1289 = vrot.lane.b32.xlu0 %v1284, 127
    %v1290 = vpop.permute.xlu0 %1289
    %1291 = vrot.lane.b32.xlu0 %v1280, 1
    %v1292 = vpop.permute.xlu0 %1291
    %1293 = vrot.lane.b32.xlu0 %v1282, 1
    %v1294 = vpop.permute.xlu0 %1293
    %1295 = vrot.lane.b32.xlu0 %v1284, 1
    %v1296 = vpop.permute.xlu0 %1295
    %vm1297 = vcmp.lt.s32.totalorder %v1286, %v1292
    %v1298 = vsel %vm1297, %v1286, %v1292
    %vm1299 = vcmp.lt.s32.totalorder %v1288, %v1294
    %v1300 = vsel %vm1299, %v1288, %v1294
    %vm1301 = vcmp.lt.s32.totalorder %v1290, %v1296
    %v1302 = vsel %vm1301, %v1290, %v1296
    %vm1303 = vcmp.lt.s32.totalorder %v1280, %v1298
    %v1304 = vsel %vm1303, %v1280, %v1298
    %vm1305 = vcmp.lt.s32.totalorder %v1282, %v1300
    %v1306 = vsel %vm1305, %v1282, %v1300
    %vm1307 = vcmp.lt.s32.totalorder %v1284, %v1302
    %v1308 = vsel %vm1307, %v1284, %v1302
    %v1309 = vrot.slane %v1304, 1
    %v1310 = vrot.slane %v1306, 1
    %v1311 = vrot.slane %v1308, 1
    %v1312 = vsel %vm44, %v1310, %v1311
    %v1313 = vsel %vm44, %v1309, %v1310
    %v1314 = vsel %vm44, %v1311, %v1309
    %v1315 = vrot.slane %v1304, 7
    %v1316 = vrot.slane %v1306, 7
    %v1317 = vrot.slane %v1308, 7
    %v1318 = vsel %vm37, %v1316, %v1317
    %v1319 = vsel %vm37, %v1315, %v1316
    %v1320 = vsel %vm37, %v1317, %v1315
    %vm1321 = vcmp.lt.s32.totalorder %v1313, %v1320
    %v1322 = vsel %vm1321, %v1313, %v1320
    %vm1323 = vcmp.lt.s32.totalorder %v1312, %v1319
    %v1324 = vsel %vm1323, %v1312, %v1319
    %vm1325 = vcmp.lt.s32.totalorder %v1314, %v1318
    %v1326 = vsel %vm1325, %v1314, %v1318
    %vm1327 = vcmp.lt.s32.totalorder %v1304, %v1322
    %v1328 = vsel %vm1327, %v1304, %v1322
    %vm1329 = vcmp.lt.s32.totalorder %v1306, %v1324
    %v1330 = vsel %vm1329, %v1306, %v1324
    %vm1331 = vcmp.lt.s32.totalorder %v1308, %v1326
    %v1332 = vsel %vm1331, %v1308, %v1326
    %vm1333 = vcmp.gt.s32.totalorder %v1328, %v997
    %v1334 = vsel %vm1333, %v1328, %v997
    %vm1335 = vcmp.gt.s32.totalorder %v1330, %v998
    %v1336 = vsel %vm1335, %v1330, %v998
    %vm1337 = vcmp.gt.s32.totalorder %v1332, %v999
    %v1338 = vsel %vm1337, %v1332, %v999
    %1339 = vrot.lane.b32.xlu0 %v1334, 127
    %v1340 = vpop.permute.xlu0 %1339
    %1341 = vrot.lane.b32.xlu0 %v1336, 127
    %v1342 = vpop.permute.xlu0 %1341
    %1343 = vrot.lane.b32.xlu0 %v1338, 127
    %v1344 = vpop.permute.xlu0 %1343
    %1345 = vrot.lane.b32.xlu0 %v1334, 1
    %v1346 = vpop.permute.xlu0 %1345
    %1347 = vrot.lane.b32.xlu0 %v1336, 1
    %v1348 = vpop.permute.xlu0 %1347
    %1349 = vrot.lane.b32.xlu0 %v1338, 1
    %v1350 = vpop.permute.xlu0 %1349
    %vm1351 = vcmp.lt.s32.totalorder %v1340, %v1346
    %v1352 = vsel %vm1351, %v1340, %v1346
    %vm1353 = vcmp.lt.s32.totalorder %v1342, %v1348
    %v1354 = vsel %vm1353, %v1342, %v1348
    %vm1355 = vcmp.lt.s32.totalorder %v1344, %v1350
    %v1356 = vsel %vm1355, %v1344, %v1350
    %vm1357 = vcmp.lt.s32.totalorder %v1334, %v1352
    %v1358 = vsel %vm1357, %v1334, %v1352
    %vm1359 = vcmp.lt.s32.totalorder %v1336, %v1354
    %v1360 = vsel %vm1359, %v1336, %v1354
    %vm1361 = vcmp.lt.s32.totalorder %v1338, %v1356
    %v1362 = vsel %vm1361, %v1338, %v1356
    %v1363 = vrot.slane %v1358, 1
    %v1364 = vrot.slane %v1360, 1
    %v1365 = vrot.slane %v1362, 1
    %v1366 = vsel %vm44, %v1364, %v1365
    %v1367 = vsel %vm44, %v1363, %v1364
    %v1368 = vsel %vm44, %v1365, %v1363
    %v1369 = vrot.slane %v1358, 7
    %v1370 = vrot.slane %v1360, 7
    %v1371 = vrot.slane %v1362, 7
    %v1372 = vsel %vm37, %v1370, %v1371
    %v1373 = vsel %vm37, %v1369, %v1370
    %v1374 = vsel %vm37, %v1371, %v1369
    %vm1375 = vcmp.lt.s32.totalorder %v1367, %v1374
    %v1376 = vsel %vm1375, %v1367, %v1374
    %vm1377 = vcmp.lt.s32.totalorder %v1366, %v1373
    %v1378 = vsel %vm1377, %v1366, %v1373
    %vm1379 = vcmp.lt.s32.totalorder %v1368, %v1372
    %v1380 = vsel %vm1379, %v1368, %v1372
    %vm1381 = vcmp.lt.s32.totalorder %v1358, %v1376
    %v1382 = vsel %vm1381, %v1358, %v1376
    %vm1383 = vcmp.lt.s32.totalorder %v1360, %v1378
    %v1384 = vsel %vm1383, %v1360, %v1378
    %vm1385 = vcmp.lt.s32.totalorder %v1362, %v1380
    %v1386 = vsel %vm1385, %v1362, %v1380
    %vm1387 = vcmp.gt.s32.totalorder %v1382, %v997
    %v1388 = vsel %vm1387, %v1382, %v997
    %vm1389 = vcmp.gt.s32.totalorder %v1384, %v998
    %v1390 = vsel %vm1389, %v1384, %v998
    %vm1391 = vcmp.gt.s32.totalorder %v1386, %v999
    %v1392 = vsel %vm1391, %v1386, %v999
    %1393 = vrot.lane.b32.xlu0 %v1388, 127
    %v1394 = vpop.permute.xlu0 %1393
    %1395 = vrot.lane.b32.xlu0 %v1390, 127
    %v1396 = vpop.permute.xlu0 %1395
    %1397 = vrot.lane.b32.xlu0 %v1392, 127
    %v1398 = vpop.permute.xlu0 %1397
    %1399 = vrot.lane.b32.xlu0 %v1388, 1
    %v1400 = vpop.permute.xlu0 %1399
    %1401 = vrot.lane.b32.xlu0 %v1390, 1
    %v1402 = vpop.permute.xlu0 %1401
    %1403 = vrot.lane.b32.xlu0 %v1392, 1
    %v1404 = vpop.permute.xlu0 %1403
    %vm1405 = vcmp.lt.s32.totalorder %v1394, %v1400
    %v1406 = vsel %vm1405, %v1394, %v1400
    %vm1407 = vcmp.lt.s32.totalorder %v1396, %v1402
    %v1408 = vsel %vm1407, %v1396, %v1402
    %vm1409 = vcmp.lt.s32.totalorder %v1398, %v1404
    %v1410 = vsel %vm1409, %v1398, %v1404
    %vm1411 = vcmp.lt.s32.totalorder %v1388, %v1406
    %v1412 = vsel %vm1411, %v1388, %v1406
    %vm1413 = vcmp.lt.s32.totalorder %v1390, %v1408
    %v1414 = vsel %vm1413, %v1390, %v1408
    %vm1415 = vcmp.lt.s32.totalorder %v1392, %v1410
    %v1416 = vsel %vm1415, %v1392, %v1410
    %v1417 = vrot.slane %v1412, 1
    %v1418 = vrot.slane %v1414, 1
    %v1419 = vrot.slane %v1416, 1
    %v1420 = vsel %vm44, %v1418, %v1419
    %v1421 = vsel %vm44, %v1417, %v1418
    %v1422 = vsel %vm44, %v1419, %v1417
    %v1423 = vrot.slane %v1412, 7
    %v1424 = vrot.slane %v1414, 7
    %v1425 = vrot.slane %v1416, 7
    %v1426 = vsel %vm37, %v1424, %v1425
    %v1427 = vsel %vm37, %v1423, %v1424
    %v1428 = vsel %vm37, %v1425, %v1423
    %vm1429 = vcmp.lt.s32.totalorder %v1421, %v1428
    %v1430 = vsel %vm1429, %v1421, %v1428
    %vm1431 = vcmp.lt.s32.totalorder %v1420, %v1427
    %v1432 = vsel %vm1431, %v1420, %v1427
    %vm1433 = vcmp.lt.s32.totalorder %v1422, %v1426
    %v1434 = vsel %vm1433, %v1422, %v1426
    %vm1435 = vcmp.lt.s32.totalorder %v1412, %v1430
    %v1436 = vsel %vm1435, %v1412, %v1430
    %vm1437 = vcmp.lt.s32.totalorder %v1414, %v1432
    %v1438 = vsel %vm1437, %v1414, %v1432
    %vm1439 = vcmp.lt.s32.totalorder %v1416, %v1434
    %v1440 = vsel %vm1439, %v1416, %v1434
    %vm1441 = vcmp.gt.s32.totalorder %v1436, %v997
    %v1442 = vsel %vm1441, %v1436, %v997
    %vm1443 = vcmp.gt.s32.totalorder %v1438, %v998
    %v1444 = vsel %vm1443, %v1438, %v998
    %vm1445 = vcmp.gt.s32.totalorder %v1440, %v999
    %v1446 = vsel %vm1445, %v1440, %v999
    %1447 = vrot.lane.b32.xlu0 %v1442, 127
    %v1448 = vpop.permute.xlu0 %1447
    %1449 = vrot.lane.b32.xlu0 %v1444, 127
    %v1450 = vpop.permute.xlu0 %1449
    %1451 = vrot.lane.b32.xlu0 %v1446, 127
    %v1452 = vpop.permute.xlu0 %1451
    %1453 = vrot.lane.b32.xlu0 %v1442, 1
    %v1454 = vpop.permute.xlu0 %1453
    %1455 = vrot.lane.b32.xlu0 %v1444, 1
    %v1456 = vpop.permute.xlu0 %1455
    %1457 = vrot.lane.b32.xlu0 %v1446, 1
    %v1458 = vpop.permute.xlu0 %1457
    %vm1459 = vcmp.lt.s32.totalorder %v1448, %v1454
    %v1460 = vsel %vm1459, %v1448, %v1454
    %vm1461 = vcmp.lt.s32.totalorder %v1450, %v1456
    %v1462 = vsel %vm1461, %v1450, %v1456
    %vm1463 = vcmp.lt.s32.totalorder %v1452, %v1458
    %v1464 = vsel %vm1463, %v1452, %v1458
    %vm1465 = vcmp.lt.s32.totalorder %v1442, %v1460
    %v1466 = vsel %vm1465, %v1442, %v1460
    %vm1467 = vcmp.lt.s32.totalorder %v1444, %v1462
    %v1468 = vsel %vm1467, %v1444, %v1462
    %vm1469 = vcmp.lt.s32.totalorder %v1446, %v1464
    %v1470 = vsel %vm1469, %v1446, %v1464
    %v1471 = vrot.slane %v1466, 1
    %v1472 = vrot.slane %v1468, 1
    %v1473 = vrot.slane %v1470, 1
    %v1474 = vsel %vm44, %v1472, %v1473
    %v1475 = vsel %vm44, %v1471, %v1472
    %v1476 = vsel %vm44, %v1473, %v1471
    %v1477 = vrot.slane %v1466, 7
    %v1478 = vrot.slane %v1468, 7
    %v1479 = vrot.slane %v1470, 7
    %v1480 = vsel %vm37, %v1478, %v1479
    %v1481 = vsel %vm37, %v1477, %v1478
    %v1482 = vsel %vm37, %v1479, %v1477
    %vm1483 = vcmp.lt.s32.totalorder %v1475, %v1482
    %v1484 = vsel %vm1483, %v1475, %v1482
    %vm1485 = vcmp.lt.s32.totalorder %v1474, %v1481
    %v1486 = vsel %vm1485, %v1474, %v1481
    %vm1487 = vcmp.lt.s32.totalorder %v1476, %v1480
    %v1488 = vsel %vm1487, %v1476, %v1480
    %vm1489 = vcmp.lt.s32.totalorder %v1466, %v1484
    %v1490 = vsel %vm1489, %v1466, %v1484
    %vm1491 = vcmp.lt.s32.totalorder %v1468, %v1486
    %v1492 = vsel %vm1491, %v1468, %v1486
    %vm1493 = vcmp.lt.s32.totalorder %v1470, %v1488
    %v1494 = vsel %vm1493, %v1470, %v1488
    %vm1495 = vcmp.gt.s32.totalorder %v1490, %v997
    %v1496 = vsel %vm1495, %v1490, %v997
    %vm1497 = vcmp.gt.s32.totalorder %v1492, %v998
    %v1498 = vsel %vm1497, %v1492, %v998
    %vm1499 = vcmp.gt.s32.totalorder %v1494, %v999
    %v1500 = vsel %vm1499, %v1494, %v999
    %1501 = vrot.lane.b32.xlu0 %v1496, 127
    %v1502 = vpop.permute.xlu0 %1501
    %1503 = vrot.lane.b32.xlu0 %v1498, 127
    %v1504 = vpop.permute.xlu0 %1503
    %1505 = vrot.lane.b32.xlu0 %v1500, 127
    %v1506 = vpop.permute.xlu0 %1505
    %1507 = vrot.lane.b32.xlu0 %v1496, 1
    %v1508 = vpop.permute.xlu0 %1507
    %1509 = vrot.lane.b32.xlu0 %v1498, 1
    %v1510 = vpop.permute.xlu0 %1509
    %1511 = vrot.lane.b32.xlu0 %v1500, 1
    %v1512 = vpop.permute.xlu0 %1511
    %vm1513 = vcmp.lt.s32.totalorder %v1502, %v1508
    %v1514 = vsel %vm1513, %v1502, %v1508
    %vm1515 = vcmp.lt.s32.totalorder %v1504, %v1510
    %v1516 = vsel %vm1515, %v1504, %v1510
    %vm1517 = vcmp.lt.s32.totalorder %v1506, %v1512
    %v1518 = vsel %vm1517, %v1506, %v1512
    %vm1519 = vcmp.lt.s32.totalorder %v1496, %v1514
    %v1520 = vsel %vm1519, %v1496, %v1514
    %vm1521 = vcmp.lt.s32.totalorder %v1498, %v1516
    %v1522 = vsel %vm1521, %v1498, %v1516
    %vm1523 = vcmp.lt.s32.totalorder %v1500, %v1518
    %v1524 = vsel %vm1523, %v1500, %v1518
    %v1525 = vrot.slane %v1520, 1
    %v1526 = vrot.slane %v1522, 1
    %v1527 = vrot.slane %v1524, 1
    %v1528 = vsel %vm44, %v1526, %v1527
    %v1529 = vsel %vm44, %v1525, %v1526
    %v1530 = vsel %vm44, %v1527, %v1525
    %v1531 = vrot.slane %v1520, 7
    %v1532 = vrot.slane %v1522, 7
    %v1533 = vrot.slane %v1524, 7
    %v1534 = vsel %vm37, %v1532, %v1533
    %v1535 = vsel %vm37, %v1531, %v1532
    %v1536 = vsel %vm37, %v1533, %v1531
    %vm1537 = vcmp.lt.s32.totalorder %v1529, %v1536
    %v1538 = vsel %vm1537, %v1529, %v1536
    %vm1539 = vcmp.lt.s32.totalorder %v1528, %v1535
    %v1540 = vsel %vm1539, %v1528, %v1535
    %vm1541 = vcmp.lt.s32.totalorder %v1530, %v1534
    %v1542 = vsel %vm1541, %v1530, %v1534
    %vm1543 = vcmp.lt.s32.totalorder %v1520, %v1538
    %v1544 = vsel %vm1543, %v1520, %v1538
    %vm1545 = vcmp.lt.s32.totalorder %v1522, %v1540
    %v1546 = vsel %vm1545, %v1522, %v1540
    %vm1547 = vcmp.lt.s32.totalorder %v1524, %v1542
    %v1548 = vsel %vm1547, %v1524, %v1542
    %vm1549 = vcmp.gt.s32.totalorder %v1544, %v997
    %v1550 = vsel %vm1549, %v1544, %v997
    %vm1551 = vcmp.gt.s32.totalorder %v1546, %v998
    %v1552 = vsel %vm1551, %v1546, %v998
    %vm1553 = vcmp.gt.s32.totalorder %v1548, %v999
    %v1554 = vsel %vm1553, %v1548, %v999
    %1555 = vrot.lane.b32.xlu0 %v1550, 127
    %v1556 = vpop.permute.xlu0 %1555
    %1557 = vrot.lane.b32.xlu0 %v1552, 127
    %v1558 = vpop.permute.xlu0 %1557
    %1559 = vrot.lane.b32.xlu0 %v1554, 127
    %v1560 = vpop.permute.xlu0 %1559
    %1561 = vrot.lane.b32.xlu0 %v1550, 1
    %v1562 = vpop.permute.xlu0 %1561
    %1563 = vrot.lane.b32.xlu0 %v1552, 1
    %v1564 = vpop.permute.xlu0 %1563
    %1565 = vrot.lane.b32.xlu0 %v1554, 1
    %v1566 = vpop.permute.xlu0 %1565
    %vm1567 = vcmp.lt.s32.totalorder %v1556, %v1562
    %v1568 = vsel %vm1567, %v1556, %v1562
    %vm1569 = vcmp.lt.s32.totalorder %v1558, %v1564
    %v1570 = vsel %vm1569, %v1558, %v1564
    %vm1571 = vcmp.lt.s32.totalorder %v1560, %v1566
    %v1572 = vsel %vm1571, %v1560, %v1566
    %vm1573 = vcmp.lt.s32.totalorder %v1550, %v1568
    %v1574 = vsel %vm1573, %v1550, %v1568
    %vm1575 = vcmp.lt.s32.totalorder %v1552, %v1570
    %v1576 = vsel %vm1575, %v1552, %v1570
    %vm1577 = vcmp.lt.s32.totalorder %v1554, %v1572
    %v1578 = vsel %vm1577, %v1554, %v1572
    %v1579 = vrot.slane %v1574, 1
    %v1580 = vrot.slane %v1576, 1
    %v1581 = vrot.slane %v1578, 1
    %v1582 = vsel %vm44, %v1580, %v1581
    %v1583 = vsel %vm44, %v1579, %v1580
    %v1584 = vsel %vm44, %v1581, %v1579
    %v1585 = vrot.slane %v1574, 7
    %v1586 = vrot.slane %v1576, 7
    %v1587 = vrot.slane %v1578, 7
    %v1588 = vsel %vm37, %v1586, %v1587
    %v1589 = vsel %vm37, %v1585, %v1586
    %v1590 = vsel %vm37, %v1587, %v1585
    %vm1591 = vcmp.lt.s32.totalorder %v1583, %v1590
    %v1592 = vsel %vm1591, %v1583, %v1590
    %vm1593 = vcmp.lt.s32.totalorder %v1582, %v1589
    %v1594 = vsel %vm1593, %v1582, %v1589
    %vm1595 = vcmp.lt.s32.totalorder %v1584, %v1588
    %v1596 = vsel %vm1595, %v1584, %v1588
    %vm1597 = vcmp.lt.s32.totalorder %v1574, %v1592
    %v1598 = vsel %vm1597, %v1574, %v1592
    %vm1599 = vcmp.lt.s32.totalorder %v1576, %v1594
    %v1600 = vsel %vm1599, %v1576, %v1594
    %vm1601 = vcmp.lt.s32.totalorder %v1578, %v1596
    %v1602 = vsel %vm1601, %v1578, %v1596
    %vm1603 = vcmp.gt.s32.totalorder %v1598, %v997
    %v1604 = vsel %vm1603, %v1598, %v997
    %vm1605 = vcmp.gt.s32.totalorder %v1600, %v998
    %v1606 = vsel %vm1605, %v1600, %v998
    %vm1607 = vcmp.gt.s32.totalorder %v1602, %v999
    %v1608 = vsel %vm1607, %v1602, %v999
    %1609 = vrot.lane.b32.xlu0 %v1604, 127
    %v1610 = vpop.permute.xlu0 %1609
    %1611 = vrot.lane.b32.xlu0 %v1606, 127
    %v1612 = vpop.permute.xlu0 %1611
    %1613 = vrot.lane.b32.xlu0 %v1608, 127
    %v1614 = vpop.permute.xlu0 %1613
    %1615 = vrot.lane.b32.xlu0 %v1604, 1
    %v1616 = vpop.permute.xlu0 %1615
    %1617 = vrot.lane.b32.xlu0 %v1606, 1
    %v1618 = vpop.permute.xlu0 %1617
    %1619 = vrot.lane.b32.xlu0 %v1608, 1
    %v1620 = vpop.permute.xlu0 %1619
    %vm1621 = vcmp.lt.s32.totalorder %v1610, %v1616
    %v1622 = vsel %vm1621, %v1610, %v1616
    %vm1623 = vcmp.lt.s32.totalorder %v1612, %v1618
    %v1624 = vsel %vm1623, %v1612, %v1618
    %vm1625 = vcmp.lt.s32.totalorder %v1614, %v1620
    %v1626 = vsel %vm1625, %v1614, %v1620
    %vm1627 = vcmp.lt.s32.totalorder %v1604, %v1622
    %v1628 = vsel %vm1627, %v1604, %v1622
    %vm1629 = vcmp.lt.s32.totalorder %v1606, %v1624
    %v1630 = vsel %vm1629, %v1606, %v1624
    %vm1631 = vcmp.lt.s32.totalorder %v1608, %v1626
    %v1632 = vsel %vm1631, %v1608, %v1626
    %v1633 = vrot.slane %v1628, 1
    %v1634 = vrot.slane %v1630, 1
    %v1635 = vrot.slane %v1632, 1
    %v1636 = vsel %vm44, %v1634, %v1635
    %v1637 = vsel %vm44, %v1633, %v1634
    %v1638 = vsel %vm44, %v1635, %v1633
    %v1639 = vrot.slane %v1628, 7
    %v1640 = vrot.slane %v1630, 7
    %v1641 = vrot.slane %v1632, 7
    %v1642 = vsel %vm37, %v1640, %v1641
    %v1643 = vsel %vm37, %v1639, %v1640
    %v1644 = vsel %vm37, %v1641, %v1639
    %vm1645 = vcmp.lt.s32.totalorder %v1637, %v1644
    %v1646 = vsel %vm1645, %v1637, %v1644
    %vm1647 = vcmp.lt.s32.totalorder %v1636, %v1643
    %v1648 = vsel %vm1647, %v1636, %v1643
    %vm1649 = vcmp.lt.s32.totalorder %v1638, %v1642
    %v1650 = vsel %vm1649, %v1638, %v1642
    %vm1651 = vcmp.lt.s32.totalorder %v1628, %v1646
    %v1652 = vsel %vm1651, %v1628, %v1646
    %vm1653 = vcmp.lt.s32.totalorder %v1630, %v1648
    %v1654 = vsel %vm1653, %v1630, %v1648
    %vm1655 = vcmp.lt.s32.totalorder %v1632, %v1650
    %v1656 = vsel %vm1655, %v1632, %v1650
    %vm1657 = vcmp.gt.s32.totalorder %v1652, %v997
    %v1658 = vsel %vm1657, %v1652, %v997
    %vm1659 = vcmp.gt.s32.totalorder %v1654, %v998
    %v1660 = vsel %vm1659, %v1654, %v998
    %vm1661 = vcmp.gt.s32.totalorder %v1656, %v999
    %v1662 = vsel %vm1661, %v1656, %v999
    %1663 = vrot.lane.b32.xlu0 %v1658, 127
    %v1664 = vpop.permute.xlu0 %1663
    %1665 = vrot.lane.b32.xlu0 %v1660, 127
    %v1666 = vpop.permute.xlu0 %1665
    %1667 = vrot.lane.b32.xlu0 %v1662, 127
    %v1668 = vpop.permute.xlu0 %1667
    %1669 = vrot.lane.b32.xlu0 %v1658, 1
    %v1670 = vpop.permute.xlu0 %1669
    %1671 = vrot.lane.b32.xlu0 %v1660, 1
    %v1672 = vpop.permute.xlu0 %1671
    %1673 = vrot.lane.b32.xlu0 %v1662, 1
    %v1674 = vpop.permute.xlu0 %1673
    %vm1675 = vcmp.lt.s32.totalorder %v1664, %v1670
    %v1676 = vsel %vm1675, %v1664, %v1670
    %vm1677 = vcmp.lt.s32.totalorder %v1666, %v1672
    %v1678 = vsel %vm1677, %v1666, %v1672
    %vm1679 = vcmp.lt.s32.totalorder %v1668, %v1674
    %v1680 = vsel %vm1679, %v1668, %v1674
    %vm1681 = vcmp.lt.s32.totalorder %v1658, %v1676
    %v1682 = vsel %vm1681, %v1658, %v1676
    %vm1683 = vcmp.lt.s32.totalorder %v1660, %v1678
    %v1684 = vsel %vm1683, %v1660, %v1678
    %vm1685 = vcmp.lt.s32.totalorder %v1662, %v1680
    %v1686 = vsel %vm1685, %v1662, %v1680
    %v1687 = vrot.slane %v1682, 1
    %v1688 = vrot.slane %v1684, 1
    %v1689 = vrot.slane %v1686, 1
    %v1690 = vsel %vm44, %v1688, %v1689
    %v1691 = vsel %vm44, %v1687, %v1688
    %v1692 = vsel %vm44, %v1689, %v1687
    %v1693 = vrot.slane %v1682, 7
    %v1694 = vrot.slane %v1684, 7
    %v1695 = vrot.slane %v1686, 7
    %v1696 = vsel %vm37, %v1694, %v1695
    %v1697 = vsel %vm37, %v1693, %v1694
    %v1698 = vsel %vm37, %v1695, %v1693
    %vm1699 = vcmp.lt.s32.totalorder %v1691, %v1698
    %v1700 = vsel %vm1699, %v1691, %v1698
    %vm1701 = vcmp.lt.s32.totalorder %v1690, %v1697
    %v1702 = vsel %vm1701, %v1690, %v1697
    %vm1703 = vcmp.lt.s32.totalorder %v1692, %v1696
    %v1704 = vsel %vm1703, %v1692, %v1696
    %vm1705 = vcmp.lt.s32.totalorder %v1682, %v1700
    %v1706 = vsel %vm1705, %v1682, %v1700
    %vm1707 = vcmp.lt.s32.totalorder %v1684, %v1702
    %v1708 = vsel %vm1707, %v1684, %v1702
    %vm1709 = vcmp.lt.s32.totalorder %v1686, %v1704
    %v1710 = vsel %vm1709, %v1686, %v1704
    %vm1711 = vcmp.gt.s32.totalorder %v1706, %v997
    %v1712 = vsel %vm1711, %v1706, %v997
    %vm1713 = vcmp.gt.s32.totalorder %v1708, %v998
    %v1714 = vsel %vm1713, %v1708, %v998
    %vm1715 = vcmp.gt.s32.totalorder %v1710, %v999
    %v1716 = vsel %vm1715, %v1710, %v999
    %1717 = vrot.lane.b32.xlu0 %v1712, 127
    %v1718 = vpop.permute.xlu0 %1717
    %1719 = vrot.lane.b32.xlu0 %v1714, 127
    %v1720 = vpop.permute.xlu0 %1719
    %1721 = vrot.lane.b32.xlu0 %v1716, 127
    %v1722 = vpop.permute.xlu0 %1721
    %1723 = vrot.lane.b32.xlu0 %v1712, 1
    %v1724 = vpop.permute.xlu0 %1723
    %1725 = vrot.lane.b32.xlu0 %v1714, 1
    %v1726 = vpop.permute.xlu0 %1725
    %1727 = vrot.lane.b32.xlu0 %v1716, 1
    %v1728 = vpop.permute.xlu0 %1727
    %vm1729 = vcmp.lt.s32.totalorder %v1718, %v1724
    %v1730 = vsel %vm1729, %v1718, %v1724
    %vm1731 = vcmp.lt.s32.totalorder %v1720, %v1726
    %v1732 = vsel %vm1731, %v1720, %v1726
    %vm1733 = vcmp.lt.s32.totalorder %v1722, %v1728
    %v1734 = vsel %vm1733, %v1722, %v1728
    %vm1735 = vcmp.lt.s32.totalorder %v1712, %v1730
    %v1736 = vsel %vm1735, %v1712, %v1730
    %vm1737 = vcmp.lt.s32.totalorder %v1714, %v1732
    %v1738 = vsel %vm1737, %v1714, %v1732
    %vm1739 = vcmp.lt.s32.totalorder %v1716, %v1734
    %v1740 = vsel %vm1739, %v1716, %v1734
    %v1741 = vrot.slane %v1736, 1
    %v1742 = vrot.slane %v1738, 1
    %v1743 = vrot.slane %v1740, 1
    %v1744 = vsel %vm44, %v1742, %v1743
    %v1745 = vsel %vm44, %v1741, %v1742
    %v1746 = vsel %vm44, %v1743, %v1741
    %v1747 = vrot.slane %v1736, 7
    %v1748 = vrot.slane %v1738, 7
    %v1749 = vrot.slane %v1740, 7
    %v1750 = vsel %vm37, %v1748, %v1749
    %v1751 = vsel %vm37, %v1747, %v1748
    %v1752 = vsel %vm37, %v1749, %v1747
    %vm1753 = vcmp.lt.s32.totalorder %v1745, %v1752
    %v1754 = vsel %vm1753, %v1745, %v1752
    %vm1755 = vcmp.lt.s32.totalorder %v1744, %v1751
    %v1756 = vsel %vm1755, %v1744, %v1751
    %vm1757 = vcmp.lt.s32.totalorder %v1746, %v1750
    %v1758 = vsel %vm1757, %v1746, %v1750
    %vm1759 = vcmp.lt.s32.totalorder %v1736, %v1754
    %v1760 = vsel %vm1759, %v1736, %v1754
    %vm1761 = vcmp.lt.s32.totalorder %v1738, %v1756
    %v1762 = vsel %vm1761, %v1738, %v1756
    %vm1763 = vcmp.lt.s32.totalorder %v1740, %v1758
    %v1764 = vsel %vm1763, %v1740, %v1758
    %vm1765 = vcmp.gt.s32.totalorder %v1760, %v997
    %v1766 = vsel %vm1765, %v1760, %v997
    %vm1767 = vcmp.gt.s32.totalorder %v1762, %v998
    %v1768 = vsel %vm1767, %v1762, %v998
    %vm1769 = vcmp.gt.s32.totalorder %v1764, %v999
    %v1770 = vsel %vm1769, %v1764, %v999
    %1771 = vrot.lane.b32.xlu0 %v1766, 127
    %v1772 = vpop.permute.xlu0 %1771
    %1773 = vrot.lane.b32.xlu0 %v1768, 127
    %v1774 = vpop.permute.xlu0 %1773
    %1775 = vrot.lane.b32.xlu0 %v1770, 127
    %v1776 = vpop.permute.xlu0 %1775
    %1777 = vrot.lane.b32.xlu0 %v1766, 1
    %v1778 = vpop.permute.xlu0 %1777
    %1779 = vrot.lane.b32.xlu0 %v1768, 1
    %v1780 = vpop.permute.xlu0 %1779
    %1781 = vrot.lane.b32.xlu0 %v1770, 1
    %v1782 = vpop.permute.xlu0 %1781
    %vm1783 = vcmp.lt.s32.totalorder %v1772, %v1778
    %v1784 = vsel %vm1783, %v1772, %v1778
    %vm1785 = vcmp.lt.s32.totalorder %v1774, %v1780
    %v1786 = vsel %vm1785, %v1774, %v1780
    %vm1787 = vcmp.lt.s32.totalorder %v1776, %v1782
    %v1788 = vsel %vm1787, %v1776, %v1782
    %vm1789 = vcmp.lt.s32.totalorder %v1766, %v1784
    %v1790 = vsel %vm1789, %v1766, %v1784
    %vm1791 = vcmp.lt.s32.totalorder %v1768, %v1786
    %v1792 = vsel %vm1791, %v1768, %v1786
    %vm1793 = vcmp.lt.s32.totalorder %v1770, %v1788
    %v1794 = vsel %vm1793, %v1770, %v1788
    %v1795 = vrot.slane %v1790, 1
    %v1796 = vrot.slane %v1792, 1
    %v1797 = vrot.slane %v1794, 1
    %v1798 = vsel %vm44, %v1796, %v1797
    %v1799 = vsel %vm44, %v1795, %v1796
    %v1800 = vsel %vm44, %v1797, %v1795
    %v1801 = vrot.slane %v1790, 7
    %v1802 = vrot.slane %v1792, 7
    %v1803 = vrot.slane %v1794, 7
    %v1804 = vsel %vm37, %v1802, %v1803
    %v1805 = vsel %vm37, %v1801, %v1802
    %v1806 = vsel %vm37, %v1803, %v1801
    %vm1807 = vcmp.lt.s32.totalorder %v1799, %v1806
    %v1808 = vsel %vm1807, %v1799, %v1806
    %vm1809 = vcmp.lt.s32.totalorder %v1798, %v1805
    %v1810 = vsel %vm1809, %v1798, %v1805
    %vm1811 = vcmp.lt.s32.totalorder %v1800, %v1804
    %v1812 = vsel %vm1811, %v1800, %v1804
    %vm1813 = vcmp.lt.s32.totalorder %v1790, %v1808
    %v1814 = vsel %vm1813, %v1790, %v1808
    %vm1815 = vcmp.lt.s32.totalorder %v1792, %v1810
    %v1816 = vsel %vm1815, %v1792, %v1810
    %vm1817 = vcmp.lt.s32.totalorder %v1794, %v1812
    %v1818 = vsel %vm1817, %v1794, %v1812
    %vm1819 = vcmp.gt.s32.totalorder %v1814, %v997
    %v1820 = vsel %vm1819, %v1814, %v997
    %vm1821 = vcmp.gt.s32.totalorder %v1816, %v998
    %v1822 = vsel %vm1821, %v1816, %v998
    %vm1823 = vcmp.gt.s32.totalorder %v1818, %v999
    %v1824 = vsel %vm1823, %v1818, %v999
    %1825 = vrot.lane.b32.xlu0 %v1820, 127
    %v1826 = vpop.permute.xlu0 %1825
    %1827 = vrot.lane.b32.xlu0 %v1822, 127
    %v1828 = vpop.permute.xlu0 %1827
    %1829 = vrot.lane.b32.xlu0 %v1824, 127
    %v1830 = vpop.permute.xlu0 %1829
    %1831 = vrot.lane.b32.xlu0 %v1820, 1
    %v1832 = vpop.permute.xlu0 %1831
    %1833 = vrot.lane.b32.xlu0 %v1822, 1
    %v1834 = vpop.permute.xlu0 %1833
    %1835 = vrot.lane.b32.xlu0 %v1824, 1
    %v1836 = vpop.permute.xlu0 %1835
    %vm1837 = vcmp.lt.s32.totalorder %v1826, %v1832
    %v1838 = vsel %vm1837, %v1826, %v1832
    %vm1839 = vcmp.lt.s32.totalorder %v1828, %v1834
    %v1840 = vsel %vm1839, %v1828, %v1834
    %vm1841 = vcmp.lt.s32.totalorder %v1830, %v1836
    %v1842 = vsel %vm1841, %v1830, %v1836
    %vm1843 = vcmp.lt.s32.totalorder %v1820, %v1838
    %v1844 = vsel %vm1843, %v1820, %v1838
    %vm1845 = vcmp.lt.s32.totalorder %v1822, %v1840
    %v1846 = vsel %vm1845, %v1822, %v1840
    %vm1847 = vcmp.lt.s32.totalorder %v1824, %v1842
    %v1848 = vsel %vm1847, %v1824, %v1842
    %v1849 = vrot.slane %v1844, 1
    %v1850 = vrot.slane %v1846, 1
    %v1851 = vrot.slane %v1848, 1
    %v1852 = vsel %vm44, %v1850, %v1851
    %v1853 = vsel %vm44, %v1849, %v1850
    %v1854 = vsel %vm44, %v1851, %v1849
    %v1855 = vrot.slane %v1844, 7
    %v1856 = vrot.slane %v1846, 7
    %v1857 = vrot.slane %v1848, 7
    %v1858 = vsel %vm37, %v1856, %v1857
    %v1859 = vsel %vm37, %v1855, %v1856
    %v1860 = vsel %vm37, %v1857, %v1855
    %vm1861 = vcmp.lt.s32.totalorder %v1853, %v1860
    %v1862 = vsel %vm1861, %v1853, %v1860
    %vm1863 = vcmp.lt.s32.totalorder %v1852, %v1859
    %v1864 = vsel %vm1863, %v1852, %v1859
    %vm1865 = vcmp.lt.s32.totalorder %v1854, %v1858
    %v1866 = vsel %vm1865, %v1854, %v1858
    %vm1867 = vcmp.lt.s32.totalorder %v1844, %v1862
    %v1868 = vsel %vm1867, %v1844, %v1862
    %vm1869 = vcmp.lt.s32.totalorder %v1846, %v1864
    %v1870 = vsel %vm1869, %v1846, %v1864
    %vm1871 = vcmp.lt.s32.totalorder %v1848, %v1866
    %v1872 = vsel %vm1871, %v1848, %v1866
    %vm1873 = vcmp.gt.s32.totalorder %v1868, %v997
    %v1874 = vsel %vm1873, %v1868, %v997
    %vm1875 = vcmp.gt.s32.totalorder %v1870, %v998
    %v1876 = vsel %vm1875, %v1870, %v998
    %vm1877 = vcmp.gt.s32.totalorder %v1872, %v999
    %v1878 = vsel %vm1877, %v1872, %v999
    %vm1879 = vcmp.ne.s32.totalorder %v1874, %v1006
    %vm1880 = vcmp.ne.s32.totalorder %v1876, %v1007
    %vm1881 = vcmp.ne.s32.totalorder %v1878, %v1008
    %v1882 = vsel %vm1879, 1, 0
    %v1883 = vsel %vm1880, 1, 0
    %v1884 = vsel %vm1881, 1, 0
    %v1885 = vadd.s32 %v1882, %v1883
    %v1886 = vadd.s32 %v1885, %v1884
    %v1887 = vand.u32 %v1886, 65535
    %v1888 = vshrl.u32 %v1886, 16
    %v1889 = vcvt.s32.f32 %v1887
    %v1890 = vcvt.s32.f32 %v1888
    %1891 = vadd.xlane.f32.xlu0 %v1889
    %v1892 = vpop.xlane.xlu0 %1891
    %1893 = vadd.xlane.f32.xlu0 %v1890
    %v1894 = vpop.xlane.xlu0 %1893
    %v1895 = vcvt.f32.s32 %v1892
    %v1896 = vcvt.f32.s32 %v1894
    %v1897 = vshll.u32 %v1896, 16
    %v1898 = vadd.s32 %v1897, %v1895
    %v1899 = vrot.slane %v1898, 4
    %v1900 = vadd.s32 %v1898, %v1899
    %v1901 = vrot.slane %v1900, 2
    %v1902 = vadd.s32 %v1900, %v1901
    %v1903 = vrot.slane %v1902, 1
    %v1904 = vadd.s32 %v1902, %v1903
    %s1905 = vtos %v1904
    %s1906 = sadd.s32 %s1004, 1
  $region17: #{canny_forward.1} parent=0 // loop_footer
    _
  $region18: #{canny_forward.1} parent=0 // loop_footer_branch
    %1003 = sbr.rel target = $region14
  $region19: #{canny_forward.1} parent=0 // loop_exit
    _
  %v1907 = vsel %vm985, %v1006, 0
  %v1908 = vsel %vm986, %v1007, 0
  %v1909 = vsel %vm987, %v1008, 0
  %1910 = vst [vmem:[%s1] sm:$0xff] %v1907
  %1911 = vst [vmem:[%s1 + $0x8] sm:$0xff] %v1908
  %1912 = vst [vmem:[%s1 + $0x10] sm:$0xff] %v1909
  // Predicated region
  $region20: #{canny_forward.1} parent=0 // pred_check
    _
  $region21: #{canny_forward.1} parent=0 // pred_check_branch
    %1914 = sbr.rel (0) target = $region23
  $region22: #{canny_forward.1} parent=0 // pred_region
    _
  $region23: #{canny_forward.1} parent=0 // pred_fallthru
    _
  // Predicated region
  $region24: #{canny_forward.1} parent=0 // pred_check
    _
  $region25: #{canny_forward.1} parent=0 // pred_check_branch
    %1916 = sbr.rel (0) target = $region27
  $region26: #{canny_forward.1} parent=0 // pred_region
    _
  $region27: #{canny_forward.1} parent=0 // pred_fallthru
    _

</llo_original>
